<compile_context>
chip_gen: v6e
topology: v6e:2x2x1
jax: 0.10.0
libtpu: 0.0.40
codegen_flags: <defaults>
</compile_context>

<pallas_src>
import jax
import jax.numpy as jnp
import numpy as np
from jax.experimental import pallas as pl
from jax.experimental.pallas import tpu as pltpu


# ---------------------------------------------------------------------------
# Kernel
# ---------------------------------------------------------------------------
def msrb_kernel(x_ref, a1_ref, b1_ref, a2_ref, b2_ref, wb_ref, bb_ref,
                out_ref, lhs1_ref, lhs2_ref):
    """Fused MultiScaleResidualBlock2D forward on one whole-image strip.

    x_ref   : (S, H, W*C)        row-flattened NHWC input strip (S images)
    a1_ref  : (5*W*C,  W*2C)     kh-folded banded weights for fused conv5_1/conv3_1
    b1_ref  : (1, W*2C)
    a2_ref  : (5*W*2C, W*4C)     kh-folded banded weights for fused conv5_2/conv3_2
    b2_ref  : (1, W*4C)
    wb_ref  : (W*4C, W*C)        block-diagonal 1x1 bottleneck weights
    bb_ref  : (1, W*C)
    out_ref : (S, H, W*C)        residual output strip
    lhs1_ref: (S, H, 5*W*C)      im2col scratch, stage 1
    lhs2_ref: (S, H, 5*W*2C)     im2col scratch, stage 2
    """
    S, H, WC = x_ref.shape
    rows = S * H

    def mm(a, b):
        return jax.lax.dot_general(
            a, b, dimension_numbers=(((1,), (0,)), ((), ())),
            preferred_element_type=jnp.float32)

    def fill_im2col(lhs_ref, src, k_in):
        # Column block kh of the scratch holds `src` shifted by (kh-2) rows; the
        # H-direction SAME padding is the zeroed first/last rows of each block.
        # All accesses are static ref/value slices (no shifted ref loads).
        for kh in range(5):
            shift = kh - 2
            dst_lo, dst_hi = max(0, -shift), H - max(0, shift)
            blk = slice(kh * k_in, (kh + 1) * k_in)
            if dst_lo > 0:
                lhs_ref[:, 0:dst_lo, blk] = jnp.zeros((S, dst_lo, k_in), jnp.float32)
            if dst_hi < H:
                lhs_ref[:, dst_hi:H, blk] = jnp.zeros((S, H - dst_hi, k_in), jnp.float32)
            if dst_hi > dst_lo:
                lhs_ref[:, dst_lo:dst_hi, blk] = src[:, dst_lo + shift:dst_hi + shift, :]

    def conv_stage(lhs_ref, src, a_ref, b_ref):
        # One fused (5x5 + 3x3) SAME conv stage as ONE dense MXU matmul with
        # K = 5 * W * Cin; kw taps and W padding live inside the banded weights.
        k_in = src.shape[2]
        fill_im2col(lhs_ref, src, k_in)
        lhs = lhs_ref[...].reshape(rows, 5 * k_in)   # leading-dim merge only
        return mm(lhs, a_ref[...]) + b_ref[...]

    x = x_ref[...]                                                   # (S, H, WC)

    # Stage 1: per-pixel channels come out as [P1 | S1] == torch.cat([P1, S1], 1).
    y1 = jnp.maximum(conv_stage(lhs1_ref, x, a1_ref, b1_ref), 0.0)   # (rows, W*2C)
    y1_3d = y1.reshape(S, H, 2 * WC)

    # Stage 2: per-pixel channels [P2 | S2].
    y2 = jnp.maximum(conv_stage(lhs2_ref, y1_3d, a2_ref, b2_ref), 0.0)  # (rows, W*4C)

    # 1x1 bottleneck (no activation) + residual from the in-register input block.
    s = mm(y2, wb_ref[...]) + bb_ref[...]                            # (rows, W*C)
    out_ref[...] = (x + s.reshape(S, H, WC)).astype(out_ref.dtype)


# ---------------------------------------------------------------------------
# Wrapper-side weight preprocessing
# ---------------------------------------------------------------------------
def _fused_banded_weights(w5, b5, w3, b3, W):
    """Fuse a 5x5 and a 3x3 SAME conv (3x3 zero-embedded in the 5x5 footprint,
    outputs concatenated along channels) and lower the 5 kh taps to ONE kh-folded
    banded matrix A: (5*W*Ci, W*Cout) acting on row-flattened (w, c) inputs, with
    the W-direction SAME padding folded into the band."""
    Ci, Co5 = w5.shape[2], w5.shape[3]
    Co3 = w3.shape[3]
    Cout = Co5 + Co3

    wf = jnp.zeros((5, 5, Ci, Cout), jnp.float32)
    wf = wf.at[:, :, :, :Co5].set(w5.astype(jnp.float32))
    wf = wf.at[1:4, 1:4, :, Co5:].set(w3.astype(jnp.float32))

    # A[kh, j, c, w, o] = wf[kh, j - w + 2, c, o]  when 0 <= j - w + 2 < 5, else 0.
    A = jnp.zeros((5, W, Ci, W, Cout), jnp.float32)
    for kw in range(5):
        ws = np.arange(W)
        js = ws + kw - 2
        m = (js >= 0) & (js < W)
        if np.any(m):
            A = A.at[:, js[m], :, ws[m], :].set(wf[:, kw, :, :])
    A = A.reshape(5 * W * Ci, W * Cout)          # kh-folded along K

    bias = jnp.tile(jnp.concatenate([b5, b3]).astype(jnp.float32), W)
    return A, bias.reshape(1, W * Cout)


def _blockdiag_bottleneck(wb, bb, W):
    """1x1 bottleneck over per-pixel channels as a block-diagonal (W*Cin, W*Cout)."""
    cin, cout = wb.shape[2], wb.shape[3]
    wb2d = wb.reshape(cin, cout).astype(jnp.float32)
    wbf = jnp.einsum('wv,co->wcvo', jnp.eye(W, dtype=jnp.float32), wb2d)
    wbf = wbf.reshape(W * cin, W * cout)
    bbf = jnp.tile(bb.astype(jnp.float32), W).reshape(1, W * cout)
    return wbf, bbf


def _images_per_strip(N, H, target_rows=256):
    """Smallest divisor of N giving >= target_rows matmul rows per strip (whole
    images only, so halos are always the true image border); falls back to N."""
    for d in range(1, N + 1):
        if N % d == 0 and d * H >= target_rows:
            return d
    return N


# ---------------------------------------------------------------------------
# Pallas call wrapper
# ---------------------------------------------------------------------------
def multi_scale_residual_block(x_nchw, params):
    """x_nchw: (N, C, H, W) float32; params as produced by init_params. Returns NCHW."""
    N, C, H, W = x_nchw.shape
    Co = C  # residual x + S requires out_channels == in_channels
    w51, b51, w31, b31, w52, b52, w32, b32, wb, bb = params

    # Row-flattened NHWC input (lane dim = W*C).
    x_rows = jnp.transpose(x_nchw, (0, 2, 3, 1)).astype(jnp.float32).reshape(N, H, W * C)

    a1, b1 = _fused_banded_weights(w51, b51, w31, b31, W)   # (5*W*C,  W*2C)
    a2, b2 = _fused_banded_weights(w52, b52, w32, b32, W)   # (5*W*2C, W*4C)
    wbf, bbf = _blockdiag_bottleneck(wb, bb, W)              # (W*4C,   W*C)

    ips = _images_per_strip(N, H)
    n_strips = N // ips
    rows = ips * H
    WC, WC2, WC4 = W * C, W * 2 * C, W * 4 * C

    flops = 2 * N * H * (5 * WC * WC2 + 5 * WC2 * WC4 + WC4 * W * Co)
    weight_bytes = 4 * (a1.size + b1.size + a2.size + b2.size + wbf.size + bbf.size)
    bytes_accessed = 4 * (x_rows.size + N * H * W * Co) + weight_bytes

    # Explicit VMEM budget: double-buffered weights + strip I/O blocks + im2col
    # scratch + live activations, with headroom; capped under v7x's 64 MiB.
    scratch_bytes = 4 * (rows * 5 * WC + rows * 5 * WC2)
    act_bytes = 4 * rows * (WC + WC2 + WC4 + WC)
    io_bytes = 4 * 2 * 2 * rows * WC
    vmem_limit = int(min(48 << 20,
                         max(2 * weight_bytes + scratch_bytes + io_bytes
                             + 2 * act_bytes + (4 << 20), 16 << 20)))

    def const_spec(arr):
        nd = arr.ndim
        return pl.BlockSpec(arr.shape, lambda s, _nd=nd: (0,) * _nd)

    out_rows = pl.pallas_call(
        msrb_kernel,
        out_shape=jax.ShapeDtypeStruct((N, H, W * Co), jnp.float32),
        grid_spec=pltpu.PrefetchScalarGridSpec(
            num_scalar_prefetch=0,
            grid=(n_strips,),  # whole-image strips; weights stay resident
            in_specs=[pl.BlockSpec((ips, H, W * C), lambda s: (s, 0, 0))]
                     + [const_spec(a) for a in (a1, b1, a2, b2, wbf, bbf)],
            out_specs=pl.BlockSpec((ips, H, W * Co), lambda s: (s, 0, 0)),
            scratch_shapes=[
                pltpu.VMEM((ips, H, 5 * WC), jnp.float32),   # im2col, stage 1
                pltpu.VMEM((ips, H, 5 * WC2), jnp.float32),  # im2col, stage 2
            ],
        ),
        compiler_params=pltpu.CompilerParams(
            dimension_semantics=("parallel",),      # shards strips on v7x megacore
            vmem_limit_bytes=vmem_limit),
        cost_estimate=pl.CostEstimate(flops=int(flops), transcendentals=0,
                                      bytes_accessed=int(bytes_accessed)),
    )(x_rows, a1, b1, a2, b2, wbf, bbf)

    return jnp.transpose(out_rows.reshape(N, H, W, Co), (0, 3, 1, 2))


# ---------------------------------------------------------------------------
# Parameters, reference, test
# ---------------------------------------------------------------------------
def init_params(key, C):
    """Deterministic synthetic parameters (HWIO conv weights), matching module shapes."""
    Co = C
    ks = jax.random.split(key, 10)

    def w(k, shape, scale=0.1):
        return (scale * jax.random.normal(k, shape)).astype(jnp.float32)

    w51 = w(ks[0], (5, 5, C, Co))
    b51 = w(ks[1], (Co,), 0.05)
    w31 = w(ks[2], (3, 3, C, Co))
    b31 = w(ks[3], (Co,), 0.05)
    w52 = w(ks[4], (5, 5, 2 * C, 2 * Co))
    b52 = w(ks[5], (2 * Co,), 0.05)
    w32 = w(ks[6], (3, 3, 2 * C, 2 * Co))
    b32 = w(ks[7], (2 * Co,), 0.05)
    wb = w(ks[8], (1, 1, 4 * C, Co))
    bb = w(ks[9], (Co,), 0.05)
    return (w51, b51, w31, b31, w52, b52, w32, b32, wb, bb)


def _ref_forward(x_nchw, params):
    """Pure-JAX reference mirroring the PyTorch module exactly."""
    w51, b51, w31, b31, w52, b52, w32, b32, wb, bb = params
    x = jnp.transpose(x_nchw, (0, 2, 3, 1))

    def conv(inp, wgt, bias, act):
        y = jax.lax.conv_general_dilated(
            inp, wgt, window_strides=(1, 1), padding="SAME",
            dimension_numbers=("NHWC", "HWIO", "NHWC")) + bias
        return jnp.maximum(y, 0.0) if act else y

    p1 = conv(x, w51, b51, True)
    s1 = conv(x, w31, b31, True)
    cat1 = jnp.concatenate([p1, s1], axis=-1)
    p2 = conv(cat1, w52, b52, True)
    s2 = conv(cat1, w32, b32, True)
    s = conv(jnp.concatenate([p2, s2], axis=-1), wb, bb, False)
    return jnp.transpose(x + s, (0, 3, 1, 2))


if __name__ == "__main__":
    key = jax.random.PRNGKey(0)
    k_x, k_p = jax.random.split(key)

    N, C, H, W = 2, 4, 16, 16
    x = jax.random.normal(k_x, (N, C, H, W), dtype=jnp.float32)
    params = init_params(k_p, C)

    out = jax.block_until_ready(multi_scale_residual_block(x, params))
    ref = jax.block_until_ready(_ref_forward(x, params))
    np.testing.assert_allclose(np.asarray(out), np.asarray(ref), rtol=1e-4, atol=1e-4)

    print("KERNEL_OK")
</pallas_src>

<mosaic_0001>
module attributes {stable_mosaic.version = 11 : i64} {
  func.func @msrb_kernel(%arg0: i32, %arg1: memref<2x16x64xf32, #tpu.memory_space<vmem>>, %arg2: memref<320x128xf32, #tpu.memory_space<vmem>>, %arg3: memref<1x128xf32, #tpu.memory_space<vmem>>, %arg4: memref<640x256xf32, #tpu.memory_space<vmem>>, %arg5: memref<1x256xf32, #tpu.memory_space<vmem>>, %arg6: memref<256x64xf32, #tpu.memory_space<vmem>>, %arg7: memref<1x64xf32, #tpu.memory_space<vmem>>, %arg8: memref<2x16x64xf32, #tpu.memory_space<vmem>>, %arg9: memref<2x16x320xf32, #tpu.memory_space<vmem>>, %arg10: memref<2x16x640xf32, #tpu.memory_space<vmem>>) attributes {dimension_semantics = [#tpu.dimension_semantics<parallel>], iteration_bounds = array<i64: 1>, scalar_prefetch = 0 : i64, scratch_operands = 2 : i64, tpu.core_type = #tpu.core_type<tc>, window_params = [{transform_indices = @transform_0, window_bounds = array<i64: 2, 16, 64>}, {pipeline_mode = #tpu.pipeline_mode<synchronous>, transform_indices = @transform_1, window_bounds = array<i64: 320, 128>}, {pipeline_mode = #tpu.pipeline_mode<synchronous>, transform_indices = @transform_2, window_bounds = array<i64: 1, 128>}, {pipeline_mode = #tpu.pipeline_mode<synchronous>, transform_indices = @transform_3, window_bounds = array<i64: 640, 256>}, {pipeline_mode = #tpu.pipeline_mode<synchronous>, transform_indices = @transform_4, window_bounds = array<i64: 1, 256>}, {pipeline_mode = #tpu.pipeline_mode<synchronous>, transform_indices = @transform_5, window_bounds = array<i64: 256, 64>}, {pipeline_mode = #tpu.pipeline_mode<synchronous>, transform_indices = @transform_6, window_bounds = array<i64: 1, 64>}, {transform_indices = @transform_7, window_bounds = array<i64: 2, 16, 64>}]} {
    %c0 = arith.constant 0 : index
    %c0_0 = arith.constant 0 : index
    %c0_1 = arith.constant 0 : index
    %0 = vector.load %arg1[%c0, %c0_0, %c0_1] : memref<2x16x64xf32, #tpu.memory_space<vmem>>, vector<2x16x64xf32>
    %cst = arith.constant 0.000000e+00 : f32
    %1 = vector.broadcast %cst : f32 to vector<2x2x64xf32>
    %c0_2 = arith.constant 0 : index
    %c0_3 = arith.constant 0 : index
    %c0_4 = arith.constant 0 : index
    %2 = vector.load %arg9[%c0_2, %c0_3, %c0_4] : memref<2x16x320xf32, #tpu.memory_space<vmem>>, vector<2x2x64xf32>
    tpu.vector_store %arg9[%c0_2, %c0_3, %c0_4], %1 {strides = array<i32>} : memref<2x16x320xf32, #tpu.memory_space<vmem>>, vector<2x2x64xf32>,
    %3 = vector.extract_strided_slice %0 {offsets = [0, 0, 0], sizes = [2, 14, 64], strides = [1, 1, 1]} : vector<2x16x64xf32> to vector<2x14x64xf32>
    %c0_5 = arith.constant 0 : index
    %c2 = arith.constant 2 : index
    %c0_6 = arith.constant 0 : index
    %4 = vector.load %arg9[%c0_5, %c2, %c0_6] : memref<2x16x320xf32, #tpu.memory_space<vmem>>, vector<2x14x64xf32>
    tpu.vector_store %arg9[%c0_5, %c2, %c0_6], %3 {strides = array<i32>} : memref<2x16x320xf32, #tpu.memory_space<vmem>>, vector<2x14x64xf32>,
    %cst_7 = arith.constant 0.000000e+00 : f32
    %5 = vector.broadcast %cst_7 : f32 to vector<2x1x64xf32>
    %c0_8 = arith.constant 0 : index
    %c0_9 = arith.constant 0 : index
    %c64 = arith.constant 64 : index
    %6 = vector.load %arg9[%c0_8, %c0_9, %c64] : memref<2x16x320xf32, #tpu.memory_space<vmem>>, vector<2x1x64xf32>
    tpu.vector_store %arg9[%c0_8, %c0_9, %c64], %5 {strides = array<i32>} : memref<2x16x320xf32, #tpu.memory_space<vmem>>, vector<2x1x64xf32>,
    %7 = vector.extract_strided_slice %0 {offsets = [0, 0, 0], sizes = [2, 15, 64], strides = [1, 1, 1]} : vector<2x16x64xf32> to vector<2x15x64xf32>
    %c0_10 = arith.constant 0 : index
    %c1 = arith.constant 1 : index
    %c64_11 = arith.constant 64 : index
    %8 = vector.load %arg9[%c0_10, %c1, %c64_11] : memref<2x16x320xf32, #tpu.memory_space<vmem>>, vector<2x15x64xf32>
    tpu.vector_store %arg9[%c0_10, %c1, %c64_11], %7 {strides = array<i32>} : memref<2x16x320xf32, #tpu.memory_space<vmem>>, vector<2x15x64xf32>,
    %c0_12 = arith.constant 0 : index
    %c0_13 = arith.constant 0 : index
    %c128 = arith.constant 128 : index
    %9 = vector.load %arg9[%c0_12, %c0_13, %c128] : memref<2x16x320xf32, #tpu.memory_space<vmem>>, vector<2x16x64xf32>
    tpu.vector_store %arg9[%c0_12, %c0_13, %c128], %0 {strides = array<i32>} : memref<2x16x320xf32, #tpu.memory_space<vmem>>, vector<2x16x64xf32>,
    %cst_14 = arith.constant 0.000000e+00 : f32
    %10 = vector.broadcast %cst_14 : f32 to vector<2x1x64xf32>
    %c0_15 = arith.constant 0 : index
    %c15 = arith.constant 15 : index
    %c192 = arith.constant 192 : index
    %11 = vector.load %arg9[%c0_15, %c15, %c192] : memref<2x16x320xf32, #tpu.memory_space<vmem>>, vector<2x1x64xf32>
    tpu.vector_store %arg9[%c0_15, %c15, %c192], %10 {strides = array<i32>} : memref<2x16x320xf32, #tpu.memory_space<vmem>>, vector<2x1x64xf32>,
    %12 = vector.extract_strided_slice %0 {offsets = [0, 1, 0], sizes = [2, 15, 64], strides = [1, 1, 1]} : vector<2x16x64xf32> to vector<2x15x64xf32>
    %c0_16 = arith.constant 0 : index
    %c0_17 = arith.constant 0 : index
    %c192_18 = arith.constant 192 : index
    %13 = vector.load %arg9[%c0_16, %c0_17, %c192_18] : memref<2x16x320xf32, #tpu.memory_space<vmem>>, vector<2x15x64xf32>
    tpu.vector_store %arg9[%c0_16, %c0_17, %c192_18], %12 {strides = array<i32>} : memref<2x16x320xf32, #tpu.memory_space<vmem>>, vector<2x15x64xf32>,
    %cst_19 = arith.constant 0.000000e+00 : f32
    %14 = vector.broadcast %cst_19 : f32 to vector<2x2x64xf32>
    %c0_20 = arith.constant 0 : index
    %c14 = arith.constant 14 : index
    %c256 = arith.constant 256 : index
    %15 = vector.load %arg9[%c0_20, %c14, %c256] : memref<2x16x320xf32, #tpu.memory_space<vmem>>, vector<2x2x64xf32>
    tpu.vector_store %arg9[%c0_20, %c14, %c256], %14 {strides = array<i32>} : memref<2x16x320xf32, #tpu.memory_space<vmem>>, vector<2x2x64xf32>,
    %16 = vector.extract_strided_slice %0 {offsets = [0, 2, 0], sizes = [2, 14, 64], strides = [1, 1, 1]} : vector<2x16x64xf32> to vector<2x14x64xf32>
    %c0_21 = arith.constant 0 : index
    %c0_22 = arith.constant 0 : index
    %c256_23 = arith.constant 256 : index
    %17 = vector.load %arg9[%c0_21, %c0_22, %c256_23] : memref<2x16x320xf32, #tpu.memory_space<vmem>>, vector<2x14x64xf32>
    tpu.vector_store %arg9[%c0_21, %c0_22, %c256_23], %16 {strides = array<i32>} : memref<2x16x320xf32, #tpu.memory_space<vmem>>, vector<2x14x64xf32>,
    %c0_24 = arith.constant 0 : index
    %c0_25 = arith.constant 0 : index
    %c0_26 = arith.constant 0 : index
    %18 = vector.load %arg9[%c0_24, %c0_25, %c0_26] : memref<2x16x320xf32, #tpu.memory_space<vmem>>, vector<2x16x320xf32>
    %19 = vector.shape_cast %18 : vector<2x16x320xf32> to vector<32x320xf32>
    %c0_27 = arith.constant 0 : index
    %c0_28 = arith.constant 0 : index
    %20 = vector.load %arg2[%c0_27, %c0_28] : memref<320x128xf32, #tpu.memory_space<vmem>>, vector<320x128xf32>
    %cst_29 = arith.constant dense<0.000000e+00> : vector<32x128xf32>
    %21 = tpu.matmul %19, %20, %cst_29 {dimension_numbers = #tpu.dot_dimension_numbers<[1], [0], [0], [1], [0, 0, 1, 1], [], []>} : vector<32x320xf32>, vector<320x128xf32>, vector<32x128xf32> -> vector<32x128xf32>
    %c0_30 = arith.constant 0 : index
    %c0_31 = arith.constant 0 : index
    %22 = vector.load %arg3[%c0_30, %c0_31] : memref<1x128xf32, #tpu.memory_space<vmem>>, vector<1x128xf32>
    %23 = vector.broadcast %22 : vector<1x128xf32> to vector<32x128xf32>
    %24 = arith.addf %21, %23 : vector<32x128xf32>
    %cst_32 = arith.constant 0.000000e+00 : f32
    %25 = vector.broadcast %cst_32 : f32 to vector<32x128xf32>
    %26 = arith.maximumf %24, %25 : vector<32x128xf32>
    %27 = vector.shape_cast %26 : vector<32x128xf32> to vector<2x16x128xf32>
    %cst_33 = arith.constant 0.000000e+00 : f32
    %28 = vector.broadcast %cst_33 : f32 to vector<2x2x128xf32>
    %c0_34 = arith.constant 0 : index
    %c0_35 = arith.constant 0 : index
    %c0_36 = arith.constant 0 : index
    %29 = vector.load %arg10[%c0_34, %c0_35, %c0_36] : memref<2x16x640xf32, #tpu.memory_space<vmem>>, vector<2x2x128xf32>
    tpu.vector_store %arg10[%c0_34, %c0_35, %c0_36], %28 {strides = array<i32>} : memref<2x16x640xf32, #tpu.memory_space<vmem>>, vector<2x2x128xf32>,
    %30 = vector.extract_strided_slice %27 {offsets = [0, 0, 0], sizes = [2, 14, 128], strides = [1, 1, 1]} : vector<2x16x128xf32> to vector<2x14x128xf32>
    %c0_37 = arith.constant 0 : index
    %c2_38 = arith.constant 2 : index
    %c0_39 = arith.constant 0 : index
    %31 = vector.load %arg10[%c0_37, %c2_38, %c0_39] : memref<2x16x640xf32, #tpu.memory_space<vmem>>, vector<2x14x128xf32>
    tpu.vector_store %arg10[%c0_37, %c2_38, %c0_39], %30 {strides = array<i32>} : memref<2x16x640xf32, #tpu.memory_space<vmem>>, vector<2x14x128xf32>,
    %cst_40 = arith.constant 0.000000e+00 : f32
    %32 = vector.broadcast %cst_40 : f32 to vector<2x1x128xf32>
    %c0_41 = arith.constant 0 : index
    %c0_42 = arith.constant 0 : index
    %c128_43 = arith.constant 128 : index
    %33 = vector.load %arg10[%c0_41, %c0_42, %c128_43] : memref<2x16x640xf32, #tpu.memory_space<vmem>>, vector<2x1x128xf32>
    tpu.vector_store %arg10[%c0_41, %c0_42, %c128_43], %32 {strides = array<i32>} : memref<2x16x640xf32, #tpu.memory_space<vmem>>, vector<2x1x128xf32>,
    %34 = vector.extract_strided_slice %27 {offsets = [0, 0, 0], sizes = [2, 15, 128], strides = [1, 1, 1]} : vector<2x16x128xf32> to vector<2x15x128xf32>
    %c0_44 = arith.constant 0 : index
    %c1_45 = arith.constant 1 : index
    %c128_46 = arith.constant 128 : index
    %35 = vector.load %arg10[%c0_44, %c1_45, %c128_46] : memref<2x16x640xf32, #tpu.memory_space<vmem>>, vector<2x15x128xf32>
    tpu.vector_store %arg10[%c0_44, %c1_45, %c128_46], %34 {strides = array<i32>} : memref<2x16x640xf32, #tpu.memory_space<vmem>>, vector<2x15x128xf32>,
    %c0_47 = arith.constant 0 : index
    %c0_48 = arith.constant 0 : index
    %c256_49 = arith.constant 256 : index
    %36 = vector.load %arg10[%c0_47, %c0_48, %c256_49] : memref<2x16x640xf32, #tpu.memory_space<vmem>>, vector<2x16x128xf32>
    tpu.vector_store %arg10[%c0_47, %c0_48, %c256_49], %27 {strides = array<i32>} : memref<2x16x640xf32, #tpu.memory_space<vmem>>, vector<2x16x128xf32>,
    %cst_50 = arith.constant 0.000000e+00 : f32
    %37 = vector.broadcast %cst_50 : f32 to vector<2x1x128xf32>
    %c0_51 = arith.constant 0 : index
    %c15_52 = arith.constant 15 : index
    %c384 = arith.constant 384 : index
    %38 = vector.load %arg10[%c0_51, %c15_52, %c384] : memref<2x16x640xf32, #tpu.memory_space<vmem>>, vector<2x1x128xf32>
    tpu.vector_store %arg10[%c0_51, %c15_52, %c384], %37 {strides = array<i32>} : memref<2x16x640xf32, #tpu.memory_space<vmem>>, vector<2x1x128xf32>,
    %39 = vector.extract_strided_slice %27 {offsets = [0, 1, 0], sizes = [2, 15, 128], strides = [1, 1, 1]} : vector<2x16x128xf32> to vector<2x15x128xf32>
    %c0_53 = arith.constant 0 : index
    %c0_54 = arith.constant 0 : index
    %c384_55 = arith.constant 384 : index
    %40 = vector.load %arg10[%c0_53, %c0_54, %c384_55] : memref<2x16x640xf32, #tpu.memory_space<vmem>>, vector<2x15x128xf32>
    tpu.vector_store %arg10[%c0_53, %c0_54, %c384_55], %39 {strides = array<i32>} : memref<2x16x640xf32, #tpu.memory_space<vmem>>, vector<2x15x128xf32>,
    %cst_56 = arith.constant 0.000000e+00 : f32
    %41 = vector.broadcast %cst_56 : f32 to vector<2x2x128xf32>
    %c0_57 = arith.constant 0 : index
    %c14_58 = arith.constant 14 : index
    %c512 = arith.constant 512 : index
    %42 = vector.load %arg10[%c0_57, %c14_58, %c512] : memref<2x16x640xf32, #tpu.memory_space<vmem>>, vector<2x2x128xf32>
    tpu.vector_store %arg10[%c0_57, %c14_58, %c512], %41 {strides = array<i32>} : memref<2x16x640xf32, #tpu.memory_space<vmem>>, vector<2x2x128xf32>,
    %43 = vector.extract_strided_slice %27 {offsets = [0, 2, 0], sizes = [2, 14, 128], strides = [1, 1, 1]} : vector<2x16x128xf32> to vector<2x14x128xf32>
    %c0_59 = arith.constant 0 : index
    %c0_60 = arith.constant 0 : index
    %c512_61 = arith.constant 512 : index
    %44 = vector.load %arg10[%c0_59, %c0_60, %c512_61] : memref<2x16x640xf32, #tpu.memory_space<vmem>>, vector<2x14x128xf32>
    tpu.vector_store %arg10[%c0_59, %c0_60, %c512_61], %43 {strides = array<i32>} : memref<2x16x640xf32, #tpu.memory_space<vmem>>, vector<2x14x128xf32>,
    %c0_62 = arith.constant 0 : index
    %c0_63 = arith.constant 0 : index
    %c0_64 = arith.constant 0 : index
    %45 = vector.load %arg10[%c0_62, %c0_63, %c0_64] : memref<2x16x640xf32, #tpu.memory_space<vmem>>, vector<2x16x640xf32>
    %46 = vector.shape_cast %45 : vector<2x16x640xf32> to vector<32x640xf32>
    %c0_65 = arith.constant 0 : index
    %c0_66 = arith.constant 0 : index
    %47 = vector.load %arg4[%c0_65, %c0_66] : memref<640x256xf32, #tpu.memory_space<vmem>>, vector<640x256xf32>
    %cst_67 = arith.constant dense<0.000000e+00> : vector<32x256xf32>
    %48 = tpu.matmul %46, %47, %cst_67 {dimension_numbers = #tpu.dot_dimension_numbers<[1], [0], [0], [1], [0, 0, 1, 1], [], []>} : vector<32x640xf32>, vector<640x256xf32>, vector<32x256xf32> -> vector<32x256xf32>
    %c0_68 = arith.constant 0 : index
    %c0_69 = arith.constant 0 : index
    %49 = vector.load %arg5[%c0_68, %c0_69] : memref<1x256xf32, #tpu.memory_space<vmem>>, vector<1x256xf32>
    %50 = vector.broadcast %49 : vector<1x256xf32> to vector<32x256xf32>
    %51 = arith.addf %48, %50 : vector<32x256xf32>
    %cst_70 = arith.constant 0.000000e+00 : f32
    %52 = vector.broadcast %cst_70 : f32 to vector<32x256xf32>
    %53 = arith.maximumf %51, %52 : vector<32x256xf32>
    %c0_71 = arith.constant 0 : index
    %c0_72 = arith.constant 0 : index
    %54 = vector.load %arg6[%c0_71, %c0_72] : memref<256x64xf32, #tpu.memory_space<vmem>>, vector<256x64xf32>
    %cst_73 = arith.constant dense<0.000000e+00> : vector<32x64xf32>
    %55 = tpu.matmul %53, %54, %cst_73 {dimension_numbers = #tpu.dot_dimension_numbers<[1], [0], [0], [1], [0, 0, 1, 1], [], []>} : vector<32x256xf32>, vector<256x64xf32>, vector<32x64xf32> -> vector<32x64xf32>
    %c0_74 = arith.constant 0 : index
    %c0_75 = arith.constant 0 : index
    %56 = vector.load %arg7[%c0_74, %c0_75] : memref<1x64xf32, #tpu.memory_space<vmem>>, vector<1x64xf32>
    %57 = vector.broadcast %56 : vector<1x64xf32> to vector<32x64xf32>
    %58 = arith.addf %55, %57 : vector<32x64xf32>
    %59 = vector.shape_cast %58 : vector<32x64xf32> to vector<2x16x64xf32>
    %60 = arith.addf %0, %59 : vector<2x16x64xf32>
    %c0_76 = arith.constant 0 : index
    %c0_77 = arith.constant 0 : index
    %c0_78 = arith.constant 0 : index
    %61 = vector.load %arg8[%c0_76, %c0_77, %c0_78] : memref<2x16x64xf32, #tpu.memory_space<vmem>>, vector<2x16x64xf32>
    tpu.vector_store %arg8[%c0_76, %c0_77, %c0_78], %60 {strides = array<i32>} : memref<2x16x64xf32, #tpu.memory_space<vmem>>, vector<2x16x64xf32>,
    return
  }
  func.func @transform_0(%arg0: i32) -> (i32, i32, i32) {
    %c0_i32 = arith.constant 0 : i32
    %c0_i32_0 = arith.constant 0 : i32
    %c0_i32_1 = arith.constant 0 : i32
    return %arg0, %c0_i32, %c0_i32_0 : i32, i32, i32
  }
  func.func @transform_1(%arg0: i32) -> (i32, i32) {
    %c0_i32 = arith.constant 0 : i32
    %c0_i32_0 = arith.constant 0 : i32
    %c0_i32_1 = arith.constant 0 : i32
    return %c0_i32, %c0_i32_0 : i32, i32
  }
  func.func @transform_2(%arg0: i32) -> (i32, i32) {
    %c0_i32 = arith.constant 0 : i32
    %c0_i32_0 = arith.constant 0 : i32
    %c0_i32_1 = arith.constant 0 : i32
    return %c0_i32, %c0_i32_0 : i32, i32
  }
  func.func @transform_3(%arg0: i32) -> (i32, i32) {
    %c0_i32 = arith.constant 0 : i32
    %c0_i32_0 = arith.constant 0 : i32
    %c0_i32_1 = arith.constant 0 : i32
    return %c0_i32, %c0_i32_0 : i32, i32
  }
  func.func @transform_4(%arg0: i32) -> (i32, i32) {
    %c0_i32 = arith.constant 0 : i32
    %c0_i32_0 = arith.constant 0 : i32
    %c0_i32_1 = arith.constant 0 : i32
    return %c0_i32, %c0_i32_0 : i32, i32
  }
  func.func @transform_5(%arg0: i32) -> (i32, i32) {
    %c0_i32 = arith.constant 0 : i32
    %c0_i32_0 = arith.constant 0 : i32
    %c0_i32_1 = arith.constant 0 : i32
    return %c0_i32, %c0_i32_0 : i32, i32
  }
  func.func @transform_6(%arg0: i32) -> (i32, i32) {
    %c0_i32 = arith.constant 0 : i32
    %c0_i32_0 = arith.constant 0 : i32
    %c0_i32_1 = arith.constant 0 : i32
    return %c0_i32, %c0_i32_0 : i32, i32
  }
  func.func @transform_7(%arg0: i32) -> (i32, i32, i32) {
    %c0_i32 = arith.constant 0 : i32
    %c0_i32_0 = arith.constant 0 : i32
    %c0_i32_1 = arith.constant 0 : i32
    return %arg0, %c0_i32, %c0_i32_0 : i32, i32, i32
  }
}

</mosaic_0001>

<llo_original>
// kernel: tpu_custom_call.1
$region0: #{tpu_custom_call.1}
  #allocation0 [shape = 'u32[]', space=smem, size = 0x4, offset = 0x4, fixed_abs, tag = 'smem constant byte address 0x4 - core index']
  #allocation1 [shape = 'u32[144,128]{1,0:T(1,128)}', space=vmem, size = 0x12000, scoped, tag = 'internal scratch']
  #allocation2 [shape = 'f32[2,16,320]{2,1,0:T(8,128)}', space=vmem, size = 0xc000, scoped, tag = 'scratch operand']
  #allocation3 [shape = 'f32[2,16,640]{2,1,0:T(8,128)}', space=vmem, size = 0x14000, scoped, tag = 'scratch operand']
  %s0 = inlined_call_operand.vmem [shape: f32[2,16,64], index: 0, kind: input, shape index: {}]
  %s1 = inlined_call_operand.vmem [shape: f32[320,128], index: 1, kind: input, shape index: {}]
  %s2 = inlined_call_operand.vmem [shape: f32[1,128], index: 2, kind: input, shape index: {}]
  %s3 = inlined_call_operand.hbm [shape: f32[640,256], index: 3, kind: input, shape index: {}]
  %s4 = inlined_call_operand.vmem [shape: f32[1,256], index: 4, kind: input, shape index: {}]
  %s5 = inlined_call_operand.vmem [shape: f32[256,64], index: 5, kind: input, shape index: {}]
  %s6 = inlined_call_operand.vmem [shape: f32[1,64], index: 6, kind: input, shape index: {}]
  %s7 = inlined_call_operand.hbm [shape: f32[2,16,64], index: 7, kind: output, shape index: {}]
  %s8 = sld [smem:[#allocation0]]
  $region42: #{tpu_custom_call.1} parent=0
    _
  %s10 = ssub.s32 1, %s8
  %s11 = scalar_select 0, %s10, %s8
  $region1: #{tpu_custom_call.1} parent=0
    #allocation4 [shape = 'u8[655360]{0}', space=vmem, size = 0xa0000, scoped, tag = 'input window, operand 3, single buffered']
    #allocation5 [shape = 's32[1]{0}', space=sflag, size = 0x4, scoped, tag = 'scoped memory for tpu_custom_call.1']
    #allocation6 [shape = 's32[1]{0}', space=sflag, size = 0x4, scoped, tag = 'scoped memory for tpu_custom_call.1']
    #allocation7 [shape = 'u8[16384]{0}', space=vmem, size = 0x4000, scoped, tag = 'output window, operand 0, single buffered']
    %12 = vsyncpa [#allocation5], 0
    %13 = vsyncpa [#allocation6], 0
    // Predicated region
    $region2: #{tpu_custom_call.1} parent=1 // pred_check
      _
    $region3: #{tpu_custom_call.1} parent=1 // pred_check_branch
      %15 = sbr.rel (0) target = $region5
    $region4: #{tpu_custom_call.1} parent=1 // pred_region
      _
    $region5: #{tpu_custom_call.1} parent=1 // pred_fallthru
      _
    // Predicated region
    $region6: #{tpu_custom_call.1} parent=1 // pred_check
      _
    $region7: #{tpu_custom_call.1} parent=1 // pred_check_branch
      %17 = sbr.rel (0) target = $region9
    $region8: #{tpu_custom_call.1} parent=1 // pred_region
      _
    $region9: #{tpu_custom_call.1} parent=1 // pred_fallthru
      _
    // Predicated region
    $region10: #{tpu_custom_call.1} parent=1 // pred_check
      _
    $region11: #{tpu_custom_call.1} parent=1 // pred_check_branch
      %19 = sbr.rel (0) target = $region13
    $region12: #{tpu_custom_call.1} parent=1 // pred_region
      _
    $region13: #{tpu_custom_call.1} parent=1 // pred_fallthru
      _
    // Predicated region
    $region14: #{tpu_custom_call.1} parent=1 // pred_check
      _
    $region15: #{tpu_custom_call.1} parent=1 // pred_check_branch
      %21 = sbr.rel (0) target = $region17
    $region16: #{tpu_custom_call.1} parent=1 // pred_region
      %s23 = ssub.s32 20480, 20480
      %24 = vsyncadd [#allocation5], %s23
      %s25 = sshll.u32 [#allocation4], 4
      %s26 = int_to_ptr.vmem [resolvable:$true] %s25
      %31 = dma.hbm_to_vmem [thread:$0]  %s3, 20480, %s26, [#allocation5], 256, 256, 16
    $region17: #{tpu_custom_call.1} parent=1 // pred_fallthru
      _
    // Predicated region
    $region18: #{tpu_custom_call.1} parent=1 // pred_check
      _
    $region19: #{tpu_custom_call.1} parent=1 // pred_check_branch
      %33 = sbr.rel (0) target = $region21
    $region20: #{tpu_custom_call.1} parent=1 // pred_region
      _
    $region21: #{tpu_custom_call.1} parent=1 // pred_fallthru
      _
    // Predicated region
    $region22: #{tpu_custom_call.1} parent=1 // pred_check
      _
    $region23: #{tpu_custom_call.1} parent=1 // pred_check_branch
      %35 = sbr.rel (0) target = $region25
    $region24: #{tpu_custom_call.1} parent=1 // pred_region
      _
    $region25: #{tpu_custom_call.1} parent=1 // pred_fallthru
      _
    // Predicated region
    $region26: #{tpu_custom_call.1} parent=1 // pred_check
      _
    $region27: #{tpu_custom_call.1} parent=1 // pred_check_branch
      %37 = sbr.rel (0) target = $region29
    $region28: #{tpu_custom_call.1} parent=1 // pred_region
      _
    $region29: #{tpu_custom_call.1} parent=1 // pred_fallthru
      _
    // Predicated region
    $region30: #{tpu_custom_call.1} parent=1 // pred_check
      _
    $region31: #{tpu_custom_call.1} parent=1 // pred_check_branch
      %39 = sbr.rel (0) target = $region33
    $region32: #{tpu_custom_call.1} parent=1 // pred_region
      %40 = dma.done [#allocation5], 20480
    $region33: #{tpu_custom_call.1} parent=1 // pred_fallthru
      _
    %v41 = vld [vmem:[%s0] sm:$0xff]
    %v42 = vld [vmem:[%s0 + $0x8] sm:$0xff]
    %v43 = vld [vmem:[%s0 + $0x10] sm:$0xff]
    %v44 = vld [vmem:[%s0 + $0x18] sm:$0xff]
    %vm45 = vcmask 517120
    %46 = vst.msk [vmem:[#allocation2] sm:$0x3] %vm45, 0.0
    %47 = vst.msk [vmem:[#allocation2 + $0x30] sm:$0x3] %vm45, 0.0
    %vm52 = vcmask 1041408
    %v53 = vrot.slane %v41, 6
    %v54 = vrot.slane %v42, 6
    %v55 = vsel %vm52, %v53, %v54
    %v56 = vrot.slane %v43, 6
    %v57 = vrot.slane %v44, 6
    %v58 = vsel %vm52, %v56, %v57
    %vm63 = vcmask 523266
    %64 = vst.msk [vmem:[#allocation2] sm:$0xfc] %vm63, %v53
    %vm65 = vcmask 523264
    %66 = vst.msk [vmem:[#allocation2 + $0x18] sm:$0xff] %vm65, %v55
    %67 = vst.msk [vmem:[#allocation2 + $0x30] sm:$0xfc] %vm63, %v56
    %68 = vst.msk [vmem:[#allocation2 + $0x48] sm:$0xff] %vm65, %v58
    %vm69 = vcmask 1040896
    %70 = vst.msk [vmem:[#allocation2] sm:$0x1] %vm69, 0.0
    %71 = vst.msk [vmem:[#allocation2 + $0x30] sm:$0x1] %vm69, 0.0
    %vm72 = vcmask 1040384
    %v73 = vrot.slane %v41, 7
    %v74 = vrot.slane %v42, 7
    %v75 = vsel %vm72, %v73, %v74
    %v76 = vrot.slane %v43, 7
    %v77 = vrot.slane %v44, 7
    %v78 = vsel %vm72, %v76, %v77
    %79 = vrot.lane.b32.xlu0 %v73, 64
    %v80 = vpop.permute.xlu0 %79
    %81 = vrot.lane.b32.xlu0 %v75, 64
    %v82 = vpop.permute.xlu0 %81
    %83 = vrot.lane.b32.xlu0 %v76, 64
    %v84 = vpop.permute.xlu0 %83
    %85 = vrot.lane.b32.xlu0 %v78, 64
    %v86 = vpop.permute.xlu0 %85
    %vm91 = vcmask 1048065
    %92 = vst.msk [vmem:[#allocation2] sm:$0xfe] %vm91, %v80
    %vm93 = vcmask 1048064
    %94 = vst.msk [vmem:[#allocation2 + $0x18] sm:$0xff] %vm93, %v82
    %95 = vst.msk [vmem:[#allocation2 + $0x30] sm:$0xfe] %vm91, %v84
    %96 = vst.msk [vmem:[#allocation2 + $0x48] sm:$0xff] %vm93, %v86
    %97 = vst.msk [vmem:[#allocation2 + $0x8] sm:$0xff] %vm65, %v41
    %98 = vst.msk [vmem:[#allocation2 + $0x20] sm:$0xff] %vm65, %v42
    %99 = vst.msk [vmem:[#allocation2 + $0x38] sm:$0xff] %vm65, %v43
    %100 = vst.msk [vmem:[#allocation2 + $0x50] sm:$0xff] %vm65, %v44
    %101 = vst.msk [vmem:[#allocation2 + $0x27] sm:$0x1] %vm69, 0.0
    %102 = vst.msk [vmem:[#allocation2 + $0x57] sm:$0x1] %vm69, 0.0
    %vm103 = vcmask 1046528
    %v104 = vrot.slane %v41, 1
    %v105 = vrot.slane %v42, 1
    %v106 = vsel %vm103, %v104, %v105
    %v107 = vrot.slane %v43, 1
    %v108 = vrot.slane %v44, 1
    %v109 = vsel %vm103, %v107, %v108
    %110 = vrot.lane.b32.xlu0 %v106, 64
    %v111 = vpop.permute.xlu0 %110
    %112 = vrot.lane.b32.xlu0 %v105, 64
    %v113 = vpop.permute.xlu0 %112
    %114 = vrot.lane.b32.xlu0 %v109, 64
    %v115 = vpop.permute.xlu0 %114
    %116 = vrot.lane.b32.xlu0 %v108, 64
    %v117 = vpop.permute.xlu0 %116
    %122 = vst.msk [vmem:[#allocation2 + $0x8] sm:$0xff] %vm93, %v111
    %vm123 = vcmask 1047040
    %124 = vst.msk [vmem:[#allocation2 + $0x20] sm:$0x7f] %vm123, %v113
    %125 = vst.msk [vmem:[#allocation2 + $0x38] sm:$0xff] %vm93, %v115
    %126 = vst.msk [vmem:[#allocation2 + $0x50] sm:$0x7f] %vm123, %v117
    %vm127 = vcmask 523270
    %128 = vst.msk [vmem:[#allocation2 + $0x28] sm:$0xc0] %vm127, 0.0
    %129 = vst.msk [vmem:[#allocation2 + $0x58] sm:$0xc0] %vm127, 0.0
    %vm130 = vcmask 1045504
    %v131 = vrot.slane %v41, 2
    %v132 = vrot.slane %v42, 2
    %v133 = vsel %vm130, %v131, %v132
    %v134 = vrot.slane %v43, 2
    %v135 = vrot.slane %v44, 2
    %v136 = vsel %vm130, %v134, %v135
    %141 = vst.msk [vmem:[#allocation2 + $0x10] sm:$0xff] %vm65, %v133
    %vm142 = vcmask 521216
    %143 = vst.msk [vmem:[#allocation2 + $0x28] sm:$0x3f] %vm142, %v132
    %144 = vst.msk [vmem:[#allocation2 + $0x40] sm:$0xff] %vm65, %v136
    %145 = vst.msk [vmem:[#allocation2 + $0x58] sm:$0x3f] %vm142, %v135
    %v146 = vld [vmem:[#allocation2] sm:$0xff]
    %v147 = vld [vmem:[#allocation2 + $0x8] sm:$0xff]
    %v148 = vld [vmem:[#allocation2 + $0x10] sm:$0xff]
    %v149 = vld [vmem:[#allocation2 + $0x18] sm:$0xff]
    %v150 = vld [vmem:[#allocation2 + $0x20] sm:$0xff]
    %v151 = vld [vmem:[#allocation2 + $0x28] sm:$0xff]
    %v152 = vld [vmem:[#allocation2 + $0x30] sm:$0xff]
    %v153 = vld [vmem:[#allocation2 + $0x38] sm:$0xff]
    %v154 = vld [vmem:[#allocation2 + $0x40] sm:$0xff]
    %v155 = vld [vmem:[#allocation2 + $0x48] sm:$0xff]
    %v156 = vld [vmem:[#allocation2 + $0x50] sm:$0xff]
    %v157 = vld [vmem:[#allocation2 + $0x58] sm:$0xff]
    %v158 = vld [vmem:[%s1] sm:$0xff]
    %v159 = vld [vmem:[%s1 + $0x8] sm:$0xff]
    %v160 = vld [vmem:[%s1 + $0x10] sm:$0xff]
    %v161 = vld [vmem:[%s1 + $0x18] sm:$0xff]
    %v162 = vld [vmem:[%s1 + $0x20] sm:$0xff]
    %v163 = vld [vmem:[%s1 + $0x28] sm:$0xff]
    %v164 = vld [vmem:[%s1 + $0x30] sm:$0xff]
    %v165 = vld [vmem:[%s1 + $0x38] sm:$0xff]
    %v166 = vld [vmem:[%s1 + $0x40] sm:$0xff]
    %v167 = vld [vmem:[%s1 + $0x48] sm:$0xff]
    %v168 = vld [vmem:[%s1 + $0x50] sm:$0xff]
    %v169 = vld [vmem:[%s1 + $0x58] sm:$0xff]
    %v170 = vld [vmem:[%s1 + $0x60] sm:$0xff]
    %v171 = vld [vmem:[%s1 + $0x68] sm:$0xff]
    %v172 = vld [vmem:[%s1 + $0x70] sm:$0xff]
    %v173 = vld [vmem:[%s1 + $0x78] sm:$0xff]
    %v174 = vld [vmem:[%s1 + $0x80] sm:$0xff]
    %v175 = vld [vmem:[%s1 + $0x88] sm:$0xff]
    %v176 = vld [vmem:[%s1 + $0x90] sm:$0xff]
    %v177 = vld [vmem:[%s1 + $0x98] sm:$0xff]
    %v178 = vld [vmem:[%s1 + $0xa0] sm:$0xff]
    %v179 = vld [vmem:[%s1 + $0xa8] sm:$0xff]
    %v180 = vld [vmem:[%s1 + $0xb0] sm:$0xff]
    %v181 = vld [vmem:[%s1 + $0xb8] sm:$0xff]
    %v182 = vld [vmem:[%s1 + $0xc0] sm:$0xff]
    %v183 = vld [vmem:[%s1 + $0xc8] sm:$0xff]
    %v184 = vld [vmem:[%s1 + $0xd0] sm:$0xff]
    %v185 = vld [vmem:[%s1 + $0xd8] sm:$0xff]
    %v186 = vld [vmem:[%s1 + $0xe0] sm:$0xff]
    %v187 = vld [vmem:[%s1 + $0xe8] sm:$0xff]
    %v188 = vld [vmem:[%s1 + $0xf0] sm:$0xff]
    %v189 = vld [vmem:[%s1 + $0xf8] sm:$0xff]
    %v190 = vld [vmem:[%s1 + $0x100] sm:$0xff]
    %v191 = vld [vmem:[%s1 + $0x108] sm:$0xff]
    %v192 = vld [vmem:[%s1 + $0x110] sm:$0xff]
    %v193 = vld [vmem:[%s1 + $0x118] sm:$0xff]
    %v194 = vld [vmem:[%s1 + $0x120] sm:$0xff]
    %v195 = vld [vmem:[%s1 + $0x128] sm:$0xff]
    %v196 = vld [vmem:[%s1 + $0x130] sm:$0xff]
    %v197 = vld [vmem:[%s1 + $0x138] sm:$0xff]
    %v198 = vld [vmem:[%s2] sm:$0x1]
    %v200 = vlaneseq
    %v201 = vshrl.u32 %v200, 7
    %v202 = vsub.s32 0, %v201
    %v203 = vrot.slane %v198, %v202
    %v206 = vsel %vm65, %v148, 0
    %v209 = vsel %vm65, %v151, 0
    %v212 = vsel %vm65, %v154, 0
    %v215 = vsel %vm65, %v157, 0
    %217 = vmatprep.subr.mxu0 0.0
    %218 = vmatpush1.msra.mxu0 %v173
    %219 = vmatprep.subr.mxu0 0.0
    %220 = vmatpush1.msra.mxu0 %v172
    %221 = vmatprep.subr.mxu0 0.0
    %222 = vmatpush1.msra.mxu0 %v171
    %223 = vmatprep.subr.mxu0 0.0
    %224 = vmatpush1.msra.mxu0 %v170
    %225 = vmatprep.subr.mxu0 0.0
    %226 = vmatpush1.msra.mxu0 %v169
    %227 = vmatprep.subr.mxu0 0.0
    %228 = vmatpush1.msra.mxu0 %v168
    %229 = vmatprep.subr.mxu0 0.0
    %230 = vmatpush1.msra.mxu0 %v167
    %231 = vmatprep.subr.mxu0 0.0
    %232 = vmatpush1.msra.mxu0 %v166
    %233 = vmatprep.subr.mxu0 0.0
    %234 = vmatpush1.msra.mxu0 %v165
    %235 = vmatprep.subr.mxu0 0.0
    %236 = vmatpush1.msra.mxu0 %v164
    %237 = vmatprep.subr.mxu0 0.0
    %238 = vmatpush1.msra.mxu0 %v163
    %239 = vmatprep.subr.mxu0 0.0
    %240 = vmatpush1.msra.mxu0 %v162
    %241 = vmatprep.subr.mxu0 0.0
    %242 = vmatpush1.msra.mxu0 %v161
    %243 = vmatprep.subr.mxu0 0.0
    %244 = vmatpush1.msra.mxu0 %v160
    %245 = vmatprep.subr.mxu0 0.0
    %246 = vmatpush1.msra.mxu0 %v159
    %247 = vmatprep.subr.mxu0 0.0
    %248 = vmatpush1.msra.mxu0 %v158
    %249 = vmatprep.subr.mxu0 0.0
    %250 = vmatpush2.msra.mxu0 %v189
    %251 = vmatprep.subr.mxu0 0.0
    %252 = vmatpush2.msra.mxu0 %v188
    %253 = vmatprep.subr.mxu0 0.0
    %254 = vmatpush2.msra.mxu0 %v187
    %255 = vmatprep.subr.mxu0 0.0
    %256 = vmatpush2.msra.mxu0 %v186
    %257 = vmatprep.subr.mxu0 0.0
    %258 = vmatpush2.msra.mxu0 %v185
    %259 = vmatprep.subr.mxu0 0.0
    %260 = vmatpush2.msra.mxu0 %v184
    %261 = vmatprep.subr.mxu0 0.0
    %262 = vmatpush2.msra.mxu0 %v183
    %263 = vmatprep.subr.mxu0 0.0
    %264 = vmatpush2.msra.mxu0 %v182
    %265 = vmatprep.subr.mxu0 0.0
    %266 = vmatpush2.msra.mxu0 %v181
    %267 = vmatprep.subr.mxu0 0.0
    %268 = vmatpush2.msra.mxu0 %v180
    %269 = vmatprep.subr.mxu0 0.0
    %270 = vmatpush2.msra.mxu0 %v179
    %271 = vmatprep.subr.mxu0 0.0
    %272 = vmatpush2.msra.mxu0 %v178
    %273 = vmatprep.subr.mxu0 0.0
    %274 = vmatpush2.msra.mxu0 %v177
    %275 = vmatprep.subr.mxu0 0.0
    %276 = vmatpush2.msra.mxu0 %v176
    %277 = vmatprep.subr.mxu0 0.0
    %278 = vmatpush2.msra.mxu0 %v175
    %279 = vmatprep.subr.mxu0 0.0
    %280 = vmatpush2.msra.mxu0 %v174
    %281 = vmatprep.mubr.f32.mxu0 %v147
    %282 = vmatmul.mubr.f32.gmra.mxu0 %v146
    %v283 = vpop.f32.mrf.mxu0
    %v284 = vadd.f32 %v203, %v283
    %v285 = vpop.f32.mrf.mxu0
    %286 = vmatprep.mubr.f32.mxu0 %v150
    %287 = vmatmul.mubr.f32.gmra.mxu0 %v149
    %v288 = vpop.f32.mrf.mxu0
    %v289 = vadd.f32 %v203, %v288
    %v290 = vpop.f32.mrf.mxu0
    %291 = vmatprep.mubr.f32.mxu0 %v153
    %292 = vmatmul.mubr.f32.gmra.mxu0 %v152
    %v293 = vpop.f32.mrf.mxu0
    %v294 = vadd.f32 %v203, %v293
    %v295 = vpop.f32.mrf.mxu0
    %296 = vmatprep.mubr.f32.mxu0 %v156
    %297 = vmatmul.mubr.f32.gmra.mxu0 %v155
    %v298 = vpop.f32.mrf.mxu0
    %v299 = vadd.f32 %v203, %v298
    %v300 = vpop.f32.mrf.mxu0
    %301 = vdwg.mxu0
    %302 = vmatprep.subr.mxu0 0.0
    %303 = vmatpush1.msra.mxu0 0.0
    %304 = vmatprep.subr.mxu0 0.0
    %305 = vmatpush1.msra.mxu0 0.0
    %306 = vmatprep.subr.mxu0 0.0
    %307 = vmatpush1.msra.mxu0 0.0
    %308 = vmatprep.subr.mxu0 0.0
    %309 = vmatpush1.msra.mxu0 0.0
    %310 = vmatprep.subr.mxu0 0.0
    %311 = vmatpush1.msra.mxu0 0.0
    %312 = vmatprep.subr.mxu0 0.0
    %313 = vmatpush1.msra.mxu0 0.0
    %314 = vmatprep.subr.mxu0 0.0
    %315 = vmatpush1.msra.mxu0 0.0
    %316 = vmatprep.subr.mxu0 0.0
    %317 = vmatpush1.msra.mxu0 0.0
    %318 = vmatprep.subr.mxu0 0.0
    %319 = vmatpush1.msra.mxu0 %v197
    %320 = vmatprep.subr.mxu0 0.0
    %321 = vmatpush1.msra.mxu0 %v196
    %322 = vmatprep.subr.mxu0 0.0
    %323 = vmatpush1.msra.mxu0 %v195
    %324 = vmatprep.subr.mxu0 0.0
    %325 = vmatpush1.msra.mxu0 %v194
    %326 = vmatprep.subr.mxu0 0.0
    %327 = vmatpush1.msra.mxu0 %v193
    %328 = vmatprep.subr.mxu0 0.0
    %329 = vmatpush1.msra.mxu0 %v192
    %330 = vmatprep.subr.mxu0 0.0
    %331 = vmatpush1.msra.mxu0 %v191
    %332 = vmatprep.subr.mxu0 0.0
    %333 = vmatpush1.msra.mxu0 %v190
    %334 = vmatprep.subr.mxu0 0.0
    %335 = vmatpush2.msra.mxu0 0.0
    %336 = vmatprep.subr.mxu0 0.0
    %337 = vmatpush2.msra.mxu0 0.0
    %338 = vmatprep.subr.mxu0 0.0
    %339 = vmatpush2.msra.mxu0 0.0
    %340 = vmatprep.subr.mxu0 0.0
    %341 = vmatpush2.msra.mxu0 0.0
    %342 = vmatprep.subr.mxu0 0.0
    %343 = vmatpush2.msra.mxu0 0.0
    %344 = vmatprep.subr.mxu0 0.0
    %345 = vmatpush2.msra.mxu0 0.0
    %346 = vmatprep.subr.mxu0 0.0
    %347 = vmatpush2.msra.mxu0 0.0
    %348 = vmatprep.subr.mxu0 0.0
    %349 = vmatpush2.msra.mxu0 0.0
    %350 = vmatprep.subr.mxu0 0.0
    %351 = vmatpush2.msra.mxu0 0.0
    %352 = vmatprep.subr.mxu0 0.0
    %353 = vmatpush2.msra.mxu0 0.0
    %354 = vmatprep.subr.mxu0 0.0
    %355 = vmatpush2.msra.mxu0 0.0
    %356 = vmatprep.subr.mxu0 0.0
    %357 = vmatpush2.msra.mxu0 0.0
    %358 = vmatprep.subr.mxu0 0.0
    %359 = vmatpush2.msra.mxu0 0.0
    %360 = vmatprep.subr.mxu0 0.0
    %361 = vmatpush2.msra.mxu0 0.0
    %362 = vmatprep.subr.mxu0 0.0
    %363 = vmatpush2.msra.mxu0 0.0
    %364 = vmatprep.subr.mxu0 0.0
    %365 = vmatpush2.msra.mxu0 0.0
    %366 = vmatprep.mubr.f32.mxu0 0.0
    %367 = vmatmul.mubr.f32.gmra.mxu0 %v206
    %v368 = vpop.f32.mrf.mxu0
    %v369 = vadd.f32 %v284, %v368
    %v370 = vpop.f32.mrf.mxu0
    %371 = vmatprep.mubr.f32.mxu0 0.0
    %372 = vmatmul.mubr.f32.gmra.mxu0 %v209
    %v373 = vpop.f32.mrf.mxu0
    %v374 = vadd.f32 %v289, %v373
    %v375 = vpop.f32.mrf.mxu0
    %376 = vmatprep.mubr.f32.mxu0 0.0
    %377 = vmatmul.mubr.f32.gmra.mxu0 %v212
    %v378 = vpop.f32.mrf.mxu0
    %v379 = vadd.f32 %v294, %v378
    %v380 = vpop.f32.mrf.mxu0
    %381 = vmatprep.mubr.f32.mxu0 0.0
    %382 = vmatmul.mubr.f32.gmra.mxu0 %v215
    %v383 = vpop.f32.mrf.mxu0
    %v384 = vadd.f32 %v299, %v383
    %v385 = vpop.f32.mrf.mxu0
    %386 = vdwg.mxu0
    %v387 = vmax.f32 %v369, 0.0
    %v388 = vmax.f32 %v374, 0.0
    %v389 = vmax.f32 %v379, 0.0
    %v390 = vmax.f32 %v384, 0.0
    %391 = vst [vmem:[#allocation3] sm:$0x3] 0.0
    %392 = vst [vmem:[#allocation3 + $0x50] sm:$0x3] 0.0
    %v397 = vrot.slane %v387, 6
    %v398 = vrot.slane %v388, 6
    %v399 = vsel %vm52, %v397, %v398
    %v400 = vrot.slane %v389, 6
    %v401 = vrot.slane %v390, 6
    %v402 = vsel %vm52, %v400, %v401
    %407 = vst [vmem:[#allocation3] sm:$0xfc] %v397
    %408 = vst [vmem:[#allocation3 + $0x28] sm:$0xff] %v399
    %409 = vst [vmem:[#allocation3 + $0x50] sm:$0xfc] %v400
    %410 = vst [vmem:[#allocation3 + $0x78] sm:$0xff] %v402
    %411 = vst [vmem:[#allocation3 + $0x8] sm:$0x1] 0.0
    %412 = vst [vmem:[#allocation3 + $0x58] sm:$0x1] 0.0
    %v413 = vrot.slane %v387, 7
    %v414 = vrot.slane %v388, 7
    %v415 = vsel %vm72, %v413, %v414
    %v416 = vrot.slane %v389, 7
    %v417 = vrot.slane %v390, 7
    %v418 = vsel %vm72, %v416, %v417
    %423 = vst [vmem:[#allocation3 + $0x8] sm:$0xfe] %v413
    %424 = vst [vmem:[#allocation3 + $0x30] sm:$0xff] %v415
    %425 = vst [vmem:[#allocation3 + $0x58] sm:$0xfe] %v416
    %426 = vst [vmem:[#allocation3 + $0x80] sm:$0xff] %v418
    %427 = vst [vmem:[#allocation3 + $0x10] sm:$0xff] %v387
    %428 = vst [vmem:[#allocation3 + $0x38] sm:$0xff] %v388
    %429 = vst [vmem:[#allocation3 + $0x60] sm:$0xff] %v389
    %430 = vst [vmem:[#allocation3 + $0x88] sm:$0xff] %v390
    %431 = vst [vmem:[#allocation3 + $0x47] sm:$0x1] 0.0
    %432 = vst [vmem:[#allocation3 + $0x97] sm:$0x1] 0.0
    %v433 = vrot.slane %v387, 1
    %v434 = vrot.slane %v388, 1
    %v435 = vsel %vm103, %v433, %v434
    %v436 = vrot.slane %v389, 1
    %v437 = vrot.slane %v390, 1
    %v438 = vsel %vm103, %v436, %v437
    %443 = vst [vmem:[#allocation3 + $0x18] sm:$0xff] %v435
    %444 = vst [vmem:[#allocation3 + $0x40] sm:$0x7f] %v434
    %445 = vst [vmem:[#allocation3 + $0x68] sm:$0xff] %v438
    %446 = vst [vmem:[#allocation3 + $0x90] sm:$0x7f] %v437
    %447 = vst [vmem:[#allocation3 + $0x48] sm:$0xc0] 0.0
    %448 = vst [vmem:[#allocation3 + $0x98] sm:$0xc0] 0.0
    %v449 = vrot.slane %v387, 2
    %v450 = vrot.slane %v388, 2
    %v451 = vsel %vm130, %v449, %v450
    %v452 = vrot.slane %v389, 2
    %v453 = vrot.slane %v390, 2
    %v454 = vsel %vm130, %v452, %v453
    %459 = vst [vmem:[#allocation3 + $0x20] sm:$0xff] %v451
    %460 = vst [vmem:[#allocation3 + $0x48] sm:$0x3f] %v450
    %461 = vst [vmem:[#allocation3 + $0x70] sm:$0xff] %v454
    %462 = vst [vmem:[#allocation3 + $0x98] sm:$0x3f] %v453
    %v463 = vld [vmem:[#allocation3] sm:$0xff]
    %v464 = vld [vmem:[#allocation3 + $0x8] sm:$0xff]
    %v465 = vld [vmem:[#allocation3 + $0x10] sm:$0xff]
    %v466 = vld [vmem:[#allocation3 + $0x18] sm:$0xff]
    %v467 = vld [vmem:[#allocation3 + $0x20] sm:$0xff]
    %v468 = vld [vmem:[#allocation3 + $0x28] sm:$0xff]
    %v469 = vld [vmem:[#allocation3 + $0x30] sm:$0xff]
    %v470 = vld [vmem:[#allocation3 + $0x38] sm:$0xff]
    %v471 = vld [vmem:[#allocation3 + $0x40] sm:$0xff]
    %v472 = vld [vmem:[#allocation3 + $0x48] sm:$0xff]
    %v473 = vld [vmem:[#allocation3 + $0x50] sm:$0xff]
    %v474 = vld [vmem:[#allocation3 + $0x58] sm:$0xff]
    %v475 = vld [vmem:[#allocation3 + $0x60] sm:$0xff]
    %v476 = vld [vmem:[#allocation3 + $0x68] sm:$0xff]
    %v477 = vld [vmem:[#allocation3 + $0x70] sm:$0xff]
    %v478 = vld [vmem:[#allocation3 + $0x78] sm:$0xff]
    %v479 = vld [vmem:[#allocation3 + $0x80] sm:$0xff]
    %v480 = vld [vmem:[#allocation3 + $0x88] sm:$0xff]
    %v481 = vld [vmem:[#allocation3 + $0x90] sm:$0xff]
    %v482 = vld [vmem:[#allocation3 + $0x98] sm:$0xff]
    %v483 = vld [vmem:[#allocation4] sm:$0xff]
    %v484 = vld [vmem:[#allocation4 + $0x8] sm:$0xff]
    %v485 = vld [vmem:[#allocation4 + $0x10] sm:$0xff]
    %v486 = vld [vmem:[#allocation4 + $0x18] sm:$0xff]
    %v487 = vld [vmem:[#allocation4 + $0x20] sm:$0xff]
    %v488 = vld [vmem:[#allocation4 + $0x28] sm:$0xff]
    %v489 = vld [vmem:[#allocation4 + $0x30] sm:$0xff]
    %v490 = vld [vmem:[#allocation4 + $0x38] sm:$0xff]
    %v491 = vld [vmem:[#allocation4 + $0x40] sm:$0xff]
    %v492 = vld [vmem:[#allocation4 + $0x48] sm:$0xff]
    %v493 = vld [vmem:[#allocation4 + $0x50] sm:$0xff]
    %v494 = vld [vmem:[#allocation4 + $0x58] sm:$0xff]
    %v495 = vld [vmem:[#allocation4 + $0x60] sm:$0xff]
    %v496 = vld [vmem:[#allocation4 + $0x68] sm:$0xff]
    %v497 = vld [vmem:[#allocation4 + $0x70] sm:$0xff]
    %v498 = vld [vmem:[#allocation4 + $0x78] sm:$0xff]
    %v499 = vld [vmem:[#allocation4 + $0x80] sm:$0xff]
    %v500 = vld [vmem:[#allocation4 + $0x88] sm:$0xff]
    %v501 = vld [vmem:[#allocation4 + $0x90] sm:$0xff]
    %v502 = vld [vmem:[#allocation4 + $0x98] sm:$0xff]
    %v503 = vld [vmem:[#allocation4 + $0xa0] sm:$0xff]
    %v504 = vld [vmem:[#allocation4 + $0xa8] sm:$0xff]
    %v505 = vld [vmem:[#allocation4 + $0xb0] sm:$0xff]
    %v506 = vld [vmem:[#allocation4 + $0xb8] sm:$0xff]
    %v507 = vld [vmem:[#allocation4 + $0xc0] sm:$0xff]
    %v508 = vld [vmem:[#allocation4 + $0xc8] sm:$0xff]
    %v509 = vld [vmem:[#allocation4 + $0xd0] sm:$0xff]
    %v510 = vld [vmem:[#allocation4 + $0xd8] sm:$0xff]
    %v511 = vld [vmem:[#allocation4 + $0xe0] sm:$0xff]
    %v512 = vld [vmem:[#allocation4 + $0xe8] sm:$0xff]
    %v513 = vld [vmem:[#allocation4 + $0xf0] sm:$0xff]
    %v514 = vld [vmem:[#allocation4 + $0xf8] sm:$0xff]
    %v515 = vld [vmem:[#allocation4 + $0x100] sm:$0xff]
    %v516 = vld [vmem:[#allocation4 + $0x108] sm:$0xff]
    %v517 = vld [vmem:[#allocation4 + $0x110] sm:$0xff]
    %v518 = vld [vmem:[#allocation4 + $0x118] sm:$0xff]
    %v519 = vld [vmem:[#allocation4 + $0x120] sm:$0xff]
    %v520 = vld [vmem:[#allocation4 + $0x128] sm:$0xff]
    %v521 = vld [vmem:[#allocation4 + $0x130] sm:$0xff]
    %v522 = vld [vmem:[#allocation4 + $0x138] sm:$0xff]
    %v523 = vld [vmem:[#allocation4 + $0x140] sm:$0xff]
    %v524 = vld [vmem:[#allocation4 + $0x148] sm:$0xff]
    %v525 = vld [vmem:[#allocation4 + $0x150] sm:$0xff]
    %v526 = vld [vmem:[#allocation4 + $0x158] sm:$0xff]
    %v527 = vld [vmem:[#allocation4 + $0x160] sm:$0xff]
    %v528 = vld [vmem:[#allocation4 + $0x168] sm:$0xff]
    %v529 = vld [vmem:[#allocation4 + $0x170] sm:$0xff]
    %v530 = vld [vmem:[#allocation4 + $0x178] sm:$0xff]
    %v531 = vld [vmem:[#allocation4 + $0x180] sm:$0xff]
    %v532 = vld [vmem:[#allocation4 + $0x188] sm:$0xff]
    %v533 = vld [vmem:[#allocation4 + $0x190] sm:$0xff]
    %v534 = vld [vmem:[#allocation4 + $0x198] sm:$0xff]
    %v535 = vld [vmem:[#allocation4 + $0x1a0] sm:$0xff]
    %v536 = vld [vmem:[#allocation4 + $0x1a8] sm:$0xff]
    %v537 = vld [vmem:[#allocation4 + $0x1b0] sm:$0xff]
    %v538 = vld [vmem:[#allocation4 + $0x1b8] sm:$0xff]
    %v539 = vld [vmem:[#allocation4 + $0x1c0] sm:$0xff]
    %v540 = vld [vmem:[#allocation4 + $0x1c8] sm:$0xff]
    %v541 = vld [vmem:[#allocation4 + $0x1d0] sm:$0xff]
    %v542 = vld [vmem:[#allocation4 + $0x1d8] sm:$0xff]
    %v543 = vld [vmem:[#allocation4 + $0x1e0] sm:$0xff]
    %v544 = vld [vmem:[#allocation4 + $0x1e8] sm:$0xff]
    %v545 = vld [vmem:[#allocation4 + $0x1f0] sm:$0xff]
    %v546 = vld [vmem:[#allocation4 + $0x1f8] sm:$0xff]
    %v547 = vld [vmem:[#allocation4 + $0x200] sm:$0xff]
    %v548 = vld [vmem:[#allocation4 + $0x208] sm:$0xff]
    %v549 = vld [vmem:[#allocation4 + $0x210] sm:$0xff]
    %v550 = vld [vmem:[#allocation4 + $0x218] sm:$0xff]
    %v551 = vld [vmem:[#allocation4 + $0x220] sm:$0xff]
    %v552 = vld [vmem:[#allocation4 + $0x228] sm:$0xff]
    %v553 = vld [vmem:[#allocation4 + $0x230] sm:$0xff]
    %v554 = vld [vmem:[#allocation4 + $0x238] sm:$0xff]
    %v555 = vld [vmem:[#allocation4 + $0x240] sm:$0xff]
    %v556 = vld [vmem:[#allocation4 + $0x248] sm:$0xff]
    %v557 = vld [vmem:[#allocation4 + $0x250] sm:$0xff]
    %v558 = vld [vmem:[#allocation4 + $0x258] sm:$0xff]
    %v559 = vld [vmem:[#allocation4 + $0x260] sm:$0xff]
    %v560 = vld [vmem:[#allocation4 + $0x268] sm:$0xff]
    %v561 = vld [vmem:[#allocation4 + $0x270] sm:$0xff]
    %v562 = vld [vmem:[#allocation4 + $0x278] sm:$0xff]
    %v563 = vld [vmem:[#allocation4 + $0x280] sm:$0xff]
    %v564 = vld [vmem:[#allocation4 + $0x288] sm:$0xff]
    %v565 = vld [vmem:[#allocation4 + $0x290] sm:$0xff]
    %v566 = vld [vmem:[#allocation4 + $0x298] sm:$0xff]
    %v567 = vld [vmem:[#allocation4 + $0x2a0] sm:$0xff]
    %v568 = vld [vmem:[#allocation4 + $0x2a8] sm:$0xff]
    %v569 = vld [vmem:[#allocation4 + $0x2b0] sm:$0xff]
    %v570 = vld [vmem:[#allocation4 + $0x2b8] sm:$0xff]
    %v571 = vld [vmem:[#allocation4 + $0x2c0] sm:$0xff]
    %v572 = vld [vmem:[#allocation4 + $0x2c8] sm:$0xff]
    %v573 = vld [vmem:[#allocation4 + $0x2d0] sm:$0xff]
    %v574 = vld [vmem:[#allocation4 + $0x2d8] sm:$0xff]
    %v575 = vld [vmem:[#allocation4 + $0x2e0] sm:$0xff]
    %v576 = vld [vmem:[#allocation4 + $0x2e8] sm:$0xff]
    %v577 = vld [vmem:[#allocation4 + $0x2f0] sm:$0xff]
    %v578 = vld [vmem:[#allocation4 + $0x2f8] sm:$0xff]
    %v579 = vld [vmem:[#allocation4 + $0x300] sm:$0xff]
    %v580 = vld [vmem:[#allocation4 + $0x308] sm:$0xff]
    %v581 = vld [vmem:[#allocation4 + $0x310] sm:$0xff]
    %v582 = vld [vmem:[#allocation4 + $0x318] sm:$0xff]
    %v583 = vld [vmem:[#allocation4 + $0x320] sm:$0xff]
    %v584 = vld [vmem:[#allocation4 + $0x328] sm:$0xff]
    %v585 = vld [vmem:[#allocation4 + $0x330] sm:$0xff]
    %v586 = vld [vmem:[#allocation4 + $0x338] sm:$0xff]
    %v587 = vld [vmem:[#allocation4 + $0x340] sm:$0xff]
    %v588 = vld [vmem:[#allocation4 + $0x348] sm:$0xff]
    %v589 = vld [vmem:[#allocation4 + $0x350] sm:$0xff]
    %v590 = vld [vmem:[#allocation4 + $0x358] sm:$0xff]
    %v591 = vld [vmem:[#allocation4 + $0x360] sm:$0xff]
    %v592 = vld [vmem:[#allocation4 + $0x368] sm:$0xff]
    %v593 = vld [vmem:[#allocation4 + $0x370] sm:$0xff]
    %v594 = vld [vmem:[#allocation4 + $0x378] sm:$0xff]
    %v595 = vld [vmem:[#allocation4 + $0x380] sm:$0xff]
    %v596 = vld [vmem:[#allocation4 + $0x388] sm:$0xff]
    %v597 = vld [vmem:[#allocation4 + $0x390] sm:$0xff]
    %v598 = vld [vmem:[#allocation4 + $0x398] sm:$0xff]
    %v599 = vld [vmem:[#allocation4 + $0x3a0] sm:$0xff]
    %v600 = vld [vmem:[#allocation4 + $0x3a8] sm:$0xff]
    %v601 = vld [vmem:[#allocation4 + $0x3b0] sm:$0xff]
    %v602 = vld [vmem:[#allocation4 + $0x3b8] sm:$0xff]
    %v603 = vld [vmem:[#allocation4 + $0x3c0] sm:$0xff]
    %v604 = vld [vmem:[#allocation4 + $0x3c8] sm:$0xff]
    %v605 = vld [vmem:[#allocation4 + $0x3d0] sm:$0xff]
    %v606 = vld [vmem:[#allocation4 + $0x3d8] sm:$0xff]
    %v607 = vld [vmem:[#allocation4 + $0x3e0] sm:$0xff]
    %v608 = vld [vmem:[#allocation4 + $0x3e8] sm:$0xff]
    %v609 = vld [vmem:[#allocation4 + $0x3f0] sm:$0xff]
    %v610 = vld [vmem:[#allocation4 + $0x3f8] sm:$0xff]
    %v611 = vld [vmem:[#allocation4 + $0x400] sm:$0xff]
    %v612 = vld [vmem:[#allocation4 + $0x408] sm:$0xff]
    %v613 = vld [vmem:[#allocation4 + $0x410] sm:$0xff]
    %v614 = vld [vmem:[#allocation4 + $0x418] sm:$0xff]
    %v615 = vld [vmem:[#allocation4 + $0x420] sm:$0xff]
    %v616 = vld [vmem:[#allocation4 + $0x428] sm:$0xff]
    %v617 = vld [vmem:[#allocation4 + $0x430] sm:$0xff]
    %v618 = vld [vmem:[#allocation4 + $0x438] sm:$0xff]
    %v619 = vld [vmem:[#allocation4 + $0x440] sm:$0xff]
    %v620 = vld [vmem:[#allocation4 + $0x448] sm:$0xff]
    %v621 = vld [vmem:[#allocation4 + $0x450] sm:$0xff]
    %v622 = vld [vmem:[#allocation4 + $0x458] sm:$0xff]
    %v623 = vld [vmem:[#allocation4 + $0x460] sm:$0xff]
    %v624 = vld [vmem:[#allocation4 + $0x468] sm:$0xff]
    %v625 = vld [vmem:[#allocation4 + $0x470] sm:$0xff]
    %v626 = vld [vmem:[#allocation4 + $0x478] sm:$0xff]
    %v627 = vld [vmem:[#allocation4 + $0x480] sm:$0xff]
    %v628 = vld [vmem:[#allocation4 + $0x488] sm:$0xff]
    %v629 = vld [vmem:[#allocation4 + $0x490] sm:$0xff]
    %v630 = vld [vmem:[#allocation4 + $0x498] sm:$0xff]
    %v631 = vld [vmem:[#allocation4 + $0x4a0] sm:$0xff]
    %v632 = vld [vmem:[#allocation4 + $0x4a8] sm:$0xff]
    %v633 = vld [vmem:[#allocation4 + $0x4b0] sm:$0xff]
    %v634 = vld [vmem:[#allocation4 + $0x4b8] sm:$0xff]
    %v635 = vld [vmem:[#allocation4 + $0x4c0] sm:$0xff]
    %v636 = vld [vmem:[#allocation4 + $0x4c8] sm:$0xff]
    %v637 = vld [vmem:[#allocation4 + $0x4d0] sm:$0xff]
    %v638 = vld [vmem:[#allocation4 + $0x4d8] sm:$0xff]
    %v639 = vld [vmem:[#allocation4 + $0x4e0] sm:$0xff]
    %v640 = vld [vmem:[#allocation4 + $0x4e8] sm:$0xff]
    %v641 = vld [vmem:[#allocation4 + $0x4f0] sm:$0xff]
    %v642 = vld [vmem:[#allocation4 + $0x4f8] sm:$0xff]
    %v643 = vld [vmem:[%s4] sm:$0x3]
    %v645 = vlaneseq
    %v646 = vshrl.u32 %v645, 7
    %v647 = vsub.s32 0, %v646
    %v648 = vrot.slane %v643, %v647
    %v649 = vlaneseq
    %v650 = vshrl.u32 %v649, 7
    %v651 = vsub.s32 1, %v650
    %v652 = vrot.slane %v643, %v651
    %655 = vmatprep.subr.mxu0 %v514
    %656 = vmatpush1.msra.mxu0 %v513
    %657 = vmatprep.subr.mxu0 %v512
    %658 = vmatpush1.msra.mxu0 %v511
    %659 = vmatprep.subr.mxu0 %v510
    %660 = vmatpush1.msra.mxu0 %v509
    %661 = vmatprep.subr.mxu0 %v508
    %662 = vmatpush1.msra.mxu0 %v507
    %663 = vmatprep.subr.mxu0 %v506
    %664 = vmatpush1.msra.mxu0 %v505
    %665 = vmatprep.subr.mxu0 %v504
    %666 = vmatpush1.msra.mxu0 %v503
    %667 = vmatprep.subr.mxu0 %v502
    %668 = vmatpush1.msra.mxu0 %v501
    %669 = vmatprep.subr.mxu0 %v500
    %670 = vmatpush1.msra.mxu0 %v499
    %671 = vmatprep.subr.mxu0 %v498
    %672 = vmatpush1.msra.mxu0 %v497
    %673 = vmatprep.subr.mxu0 %v496
    %674 = vmatpush1.msra.mxu0 %v495
    %675 = vmatprep.subr.mxu0 %v494
    %676 = vmatpush1.msra.mxu0 %v493
    %677 = vmatprep.subr.mxu0 %v492
    %678 = vmatpush1.msra.mxu0 %v491
    %679 = vmatprep.subr.mxu0 %v490
    %680 = vmatpush1.msra.mxu0 %v489
    %681 = vmatprep.subr.mxu0 %v488
    %682 = vmatpush1.msra.mxu0 %v487
    %683 = vmatprep.subr.mxu0 %v486
    %684 = vmatpush1.msra.mxu0 %v485
    %685 = vmatprep.subr.mxu0 %v484
    %686 = vmatpush1.msra.mxu0 %v483
    %687 = vmatprep.subr.mxu0 %v546
    %688 = vmatpush2.msra.mxu0 %v545
    %689 = vmatprep.subr.mxu0 %v544
    %690 = vmatpush2.msra.mxu0 %v543
    %691 = vmatprep.subr.mxu0 %v542
    %692 = vmatpush2.msra.mxu0 %v541
    %693 = vmatprep.subr.mxu0 %v540
    %694 = vmatpush2.msra.mxu0 %v539
    %695 = vmatprep.subr.mxu0 %v538
    %696 = vmatpush2.msra.mxu0 %v537
    %697 = vmatprep.subr.mxu0 %v536
    %698 = vmatpush2.msra.mxu0 %v535
    %699 = vmatprep.subr.mxu0 %v534
    %700 = vmatpush2.msra.mxu0 %v533
    %701 = vmatprep.subr.mxu0 %v532
    %702 = vmatpush2.msra.mxu0 %v531
    %703 = vmatprep.subr.mxu0 %v530
    %704 = vmatpush2.msra.mxu0 %v529
    %705 = vmatprep.subr.mxu0 %v528
    %706 = vmatpush2.msra.mxu0 %v527
    %707 = vmatprep.subr.mxu0 %v526
    %708 = vmatpush2.msra.mxu0 %v525
    %709 = vmatprep.subr.mxu0 %v524
    %710 = vmatpush2.msra.mxu0 %v523
    %711 = vmatprep.subr.mxu0 %v522
    %712 = vmatpush2.msra.mxu0 %v521
    %713 = vmatprep.subr.mxu0 %v520
    %714 = vmatpush2.msra.mxu0 %v519
    %715 = vmatprep.subr.mxu0 %v518
    %716 = vmatpush2.msra.mxu0 %v517
    %717 = vmatprep.subr.mxu0 %v516
    %718 = vmatpush2.msra.mxu0 %v515
    %719 = vmatprep.mubr.f32.mxu0 %v464
    %720 = vmatmul.mubr.f32.gmra.mxu0 %v463
    %v721 = vpop.f32.mrf.mxu0
    %v722 = vadd.f32 %v648, %v721
    %v723 = vpop.f32.mrf.mxu0
    %v724 = vadd.f32 %v652, %v723
    %725 = vmatprep.mubr.f32.mxu0 %v469
    %726 = vmatmul.mubr.f32.gmra.mxu0 %v468
    %v727 = vpop.f32.mrf.mxu0
    %v728 = vadd.f32 %v648, %v727
    %v729 = vpop.f32.mrf.mxu0
    %v730 = vadd.f32 %v652, %v729
    %731 = vmatprep.mubr.f32.mxu0 %v474
    %732 = vmatmul.mubr.f32.gmra.mxu0 %v473
    %v733 = vpop.f32.mrf.mxu0
    %v734 = vadd.f32 %v648, %v733
    %v735 = vpop.f32.mrf.mxu0
    %v736 = vadd.f32 %v652, %v735
    %737 = vmatprep.mubr.f32.mxu0 %v479
    %738 = vmatmul.mubr.f32.gmra.mxu0 %v478
    %v739 = vpop.f32.mrf.mxu0
    %v740 = vadd.f32 %v648, %v739
    %v741 = vpop.f32.mrf.mxu0
    %v742 = vadd.f32 %v652, %v741
    %743 = vdwg.mxu0
    %744 = vmatprep.subr.mxu0 %v578
    %745 = vmatpush1.msra.mxu0 %v577
    %746 = vmatprep.subr.mxu0 %v576
    %747 = vmatpush1.msra.mxu0 %v575
    %748 = vmatprep.subr.mxu0 %v574
    %749 = vmatpush1.msra.mxu0 %v573
    %750 = vmatprep.subr.mxu0 %v572
    %751 = vmatpush1.msra.mxu0 %v571
    %752 = vmatprep.subr.mxu0 %v570
    %753 = vmatpush1.msra.mxu0 %v569
    %754 = vmatprep.subr.mxu0 %v568
    %755 = vmatpush1.msra.mxu0 %v567
    %756 = vmatprep.subr.mxu0 %v566
    %757 = vmatpush1.msra.mxu0 %v565
    %758 = vmatprep.subr.mxu0 %v564
    %759 = vmatpush1.msra.mxu0 %v563
    %760 = vmatprep.subr.mxu0 %v562
    %761 = vmatpush1.msra.mxu0 %v561
    %762 = vmatprep.subr.mxu0 %v560
    %763 = vmatpush1.msra.mxu0 %v559
    %764 = vmatprep.subr.mxu0 %v558
    %765 = vmatpush1.msra.mxu0 %v557
    %766 = vmatprep.subr.mxu0 %v556
    %767 = vmatpush1.msra.mxu0 %v555
    %768 = vmatprep.subr.mxu0 %v554
    %769 = vmatpush1.msra.mxu0 %v553
    %770 = vmatprep.subr.mxu0 %v552
    %771 = vmatpush1.msra.mxu0 %v551
    %772 = vmatprep.subr.mxu0 %v550
    %773 = vmatpush1.msra.mxu0 %v549
    %774 = vmatprep.subr.mxu0 %v548
    %775 = vmatpush1.msra.mxu0 %v547
    %776 = vmatprep.subr.mxu0 %v610
    %777 = vmatpush2.msra.mxu0 %v609
    %778 = vmatprep.subr.mxu0 %v608
    %779 = vmatpush2.msra.mxu0 %v607
    %780 = vmatprep.subr.mxu0 %v606
    %781 = vmatpush2.msra.mxu0 %v605
    %782 = vmatprep.subr.mxu0 %v604
    %783 = vmatpush2.msra.mxu0 %v603
    %784 = vmatprep.subr.mxu0 %v602
    %785 = vmatpush2.msra.mxu0 %v601
    %786 = vmatprep.subr.mxu0 %v600
    %787 = vmatpush2.msra.mxu0 %v599
    %788 = vmatprep.subr.mxu0 %v598
    %789 = vmatpush2.msra.mxu0 %v597
    %790 = vmatprep.subr.mxu0 %v596
    %791 = vmatpush2.msra.mxu0 %v595
    %792 = vmatprep.subr.mxu0 %v594
    %793 = vmatpush2.msra.mxu0 %v593
    %794 = vmatprep.subr.mxu0 %v592
    %795 = vmatpush2.msra.mxu0 %v591
    %796 = vmatprep.subr.mxu0 %v590
    %797 = vmatpush2.msra.mxu0 %v589
    %798 = vmatprep.subr.mxu0 %v588
    %799 = vmatpush2.msra.mxu0 %v587
    %800 = vmatprep.subr.mxu0 %v586
    %801 = vmatpush2.msra.mxu0 %v585
    %802 = vmatprep.subr.mxu0 %v584
    %803 = vmatpush2.msra.mxu0 %v583
    %804 = vmatprep.subr.mxu0 %v582
    %805 = vmatpush2.msra.mxu0 %v581
    %806 = vmatprep.subr.mxu0 %v580
    %807 = vmatpush2.msra.mxu0 %v579
    %808 = vmatprep.mubr.f32.mxu0 %v466
    %809 = vmatmul.mubr.f32.gmra.mxu0 %v465
    %v810 = vpop.f32.mrf.mxu0
    %v811 = vadd.f32 %v722, %v810
    %v812 = vpop.f32.mrf.mxu0
    %v813 = vadd.f32 %v724, %v812
    %814 = vmatprep.mubr.f32.mxu0 %v471
    %815 = vmatmul.mubr.f32.gmra.mxu0 %v470
    %v816 = vpop.f32.mrf.mxu0
    %v817 = vadd.f32 %v728, %v816
    %v818 = vpop.f32.mrf.mxu0
    %v819 = vadd.f32 %v730, %v818
    %820 = vmatprep.mubr.f32.mxu0 %v476
    %821 = vmatmul.mubr.f32.gmra.mxu0 %v475
    %v822 = vpop.f32.mrf.mxu0
    %v823 = vadd.f32 %v734, %v822
    %v824 = vpop.f32.mrf.mxu0
    %v825 = vadd.f32 %v736, %v824
    %826 = vmatprep.mubr.f32.mxu0 %v481
    %827 = vmatmul.mubr.f32.gmra.mxu0 %v480
    %v828 = vpop.f32.mrf.mxu0
    %v829 = vadd.f32 %v740, %v828
    %v830 = vpop.f32.mrf.mxu0
    %v831 = vadd.f32 %v742, %v830
    %832 = vdwg.mxu0
    %833 = vmatprep.subr.mxu0 %v642
    %834 = vmatpush1.msra.mxu0 %v641
    %835 = vmatprep.subr.mxu0 %v640
    %836 = vmatpush1.msra.mxu0 %v639
    %837 = vmatprep.subr.mxu0 %v638
    %838 = vmatpush1.msra.mxu0 %v637
    %839 = vmatprep.subr.mxu0 %v636
    %840 = vmatpush1.msra.mxu0 %v635
    %841 = vmatprep.subr.mxu0 %v634
    %842 = vmatpush1.msra.mxu0 %v633
    %843 = vmatprep.subr.mxu0 %v632
    %844 = vmatpush1.msra.mxu0 %v631
    %845 = vmatprep.subr.mxu0 %v630
    %846 = vmatpush1.msra.mxu0 %v629
    %847 = vmatprep.subr.mxu0 %v628
    %848 = vmatpush1.msra.mxu0 %v627
    %849 = vmatprep.subr.mxu0 %v626
    %850 = vmatpush1.msra.mxu0 %v625
    %851 = vmatprep.subr.mxu0 %v624
    %852 = vmatpush1.msra.mxu0 %v623
    %853 = vmatprep.subr.mxu0 %v622
    %854 = vmatpush1.msra.mxu0 %v621
    %855 = vmatprep.subr.mxu0 %v620
    %856 = vmatpush1.msra.mxu0 %v619
    %857 = vmatprep.subr.mxu0 %v618
    %858 = vmatpush1.msra.mxu0 %v617
    %859 = vmatprep.subr.mxu0 %v616
    %860 = vmatpush1.msra.mxu0 %v615
    %861 = vmatprep.subr.mxu0 %v614
    %862 = vmatpush1.msra.mxu0 %v613
    %863 = vmatprep.subr.mxu0 %v612
    %864 = vmatpush1.msra.mxu0 %v611
    %865 = vmatprep.subr.mxu0 0.0
    %866 = vmatpush2.msra.mxu0 0.0
    %867 = vmatprep.subr.mxu0 0.0
    %868 = vmatpush2.msra.mxu0 0.0
    %869 = vmatprep.subr.mxu0 0.0
    %870 = vmatpush2.msra.mxu0 0.0
    %871 = vmatprep.subr.mxu0 0.0
    %872 = vmatpush2.msra.mxu0 0.0
    %873 = vmatprep.subr.mxu0 0.0
    %874 = vmatpush2.msra.mxu0 0.0
    %875 = vmatprep.subr.mxu0 0.0
    %876 = vmatpush2.msra.mxu0 0.0
    %877 = vmatprep.subr.mxu0 0.0
    %878 = vmatpush2.msra.mxu0 0.0
    %879 = vmatprep.subr.mxu0 0.0
    %880 = vmatpush2.msra.mxu0 0.0
    %881 = vmatprep.subr.mxu0 0.0
    %882 = vmatpush2.msra.mxu0 0.0
    %883 = vmatprep.subr.mxu0 0.0
    %884 = vmatpush2.msra.mxu0 0.0
    %885 = vmatprep.subr.mxu0 0.0
    %886 = vmatpush2.msra.mxu0 0.0
    %887 = vmatprep.subr.mxu0 0.0
    %888 = vmatpush2.msra.mxu0 0.0
    %889 = vmatprep.subr.mxu0 0.0
    %890 = vmatpush2.msra.mxu0 0.0
    %891 = vmatprep.subr.mxu0 0.0
    %892 = vmatpush2.msra.mxu0 0.0
    %893 = vmatprep.subr.mxu0 0.0
    %894 = vmatpush2.msra.mxu0 0.0
    %895 = vmatprep.subr.mxu0 0.0
    %896 = vmatpush2.msra.mxu0 0.0
    %897 = vmatprep.mubr.f32.mxu0 0.0
    %898 = vmatmul.mubr.f32.gmra.mxu0 %v467
    %v899 = vpop.f32.mrf.mxu0
    %v900 = vadd.f32 %v811, %v899
    %v901 = vpop.f32.mrf.mxu0
    %v902 = vadd.f32 %v813, %v901
    %903 = vmatprep.mubr.f32.mxu0 0.0
    %904 = vmatmul.mubr.f32.gmra.mxu0 %v472
    %v905 = vpop.f32.mrf.mxu0
    %v906 = vadd.f32 %v817, %v905
    %v907 = vpop.f32.mrf.mxu0
    %v908 = vadd.f32 %v819, %v907
    %909 = vmatprep.mubr.f32.mxu0 0.0
    %910 = vmatmul.mubr.f32.gmra.mxu0 %v477
    %v911 = vpop.f32.mrf.mxu0
    %v912 = vadd.f32 %v823, %v911
    %v913 = vpop.f32.mrf.mxu0
    %v914 = vadd.f32 %v825, %v913
    %915 = vmatprep.mubr.f32.mxu0 0.0
    %916 = vmatmul.mubr.f32.gmra.mxu0 %v482
    %v917 = vpop.f32.mrf.mxu0
    %v918 = vadd.f32 %v829, %v917
    %v919 = vpop.f32.mrf.mxu0
    %v920 = vadd.f32 %v831, %v919
    %921 = vdwg.mxu0
    %v922 = vmax.f32 %v900, 0.0
    %v923 = vmax.f32 %v902, 0.0
    %v924 = vmax.f32 %v906, 0.0
    %v925 = vmax.f32 %v908, 0.0
    %v926 = vmax.f32 %v912, 0.0
    %v927 = vmax.f32 %v914, 0.0
    %v928 = vmax.f32 %v918, 0.0
    %v929 = vmax.f32 %v920, 0.0
    %v930 = vld [vmem:[%s5] sm:$0xff]
    %v931 = vld [vmem:[%s5 + $0x8] sm:$0xff]
    %v932 = vld [vmem:[%s5 + $0x10] sm:$0xff]
    %v933 = vld [vmem:[%s5 + $0x18] sm:$0xff]
    %v934 = vld [vmem:[%s5 + $0x20] sm:$0xff]
    %v935 = vld [vmem:[%s5 + $0x28] sm:$0xff]
    %v936 = vld [vmem:[%s5 + $0x30] sm:$0xff]
    %v937 = vld [vmem:[%s5 + $0x38] sm:$0xff]
    %v938 = vld [vmem:[%s5 + $0x40] sm:$0xff]
    %v939 = vld [vmem:[%s5 + $0x48] sm:$0xff]
    %v940 = vld [vmem:[%s5 + $0x50] sm:$0xff]
    %v941 = vld [vmem:[%s5 + $0x58] sm:$0xff]
    %v942 = vld [vmem:[%s5 + $0x60] sm:$0xff]
    %v943 = vld [vmem:[%s5 + $0x68] sm:$0xff]
    %v944 = vld [vmem:[%s5 + $0x70] sm:$0xff]
    %v945 = vld [vmem:[%s5 + $0x78] sm:$0xff]
    %v946 = vld [vmem:[%s5 + $0x80] sm:$0xff]
    %v947 = vld [vmem:[%s5 + $0x88] sm:$0xff]
    %v948 = vld [vmem:[%s5 + $0x90] sm:$0xff]
    %v949 = vld [vmem:[%s5 + $0x98] sm:$0xff]
    %v950 = vld [vmem:[%s5 + $0xa0] sm:$0xff]
    %v951 = vld [vmem:[%s5 + $0xa8] sm:$0xff]
    %v952 = vld [vmem:[%s5 + $0xb0] sm:$0xff]
    %v953 = vld [vmem:[%s5 + $0xb8] sm:$0xff]
    %v954 = vld [vmem:[%s5 + $0xc0] sm:$0xff]
    %v955 = vld [vmem:[%s5 + $0xc8] sm:$0xff]
    %v956 = vld [vmem:[%s5 + $0xd0] sm:$0xff]
    %v957 = vld [vmem:[%s5 + $0xd8] sm:$0xff]
    %v958 = vld [vmem:[%s5 + $0xe0] sm:$0xff]
    %v959 = vld [vmem:[%s5 + $0xe8] sm:$0xff]
    %v960 = vld [vmem:[%s5 + $0xf0] sm:$0xff]
    %v961 = vld [vmem:[%s5 + $0xf8] sm:$0xff]
    %v962 = vld [vmem:[%s6] sm:$0x1]
    %v964 = vlaneseq
    %v965 = vshrl.u32 %v964, 7
    %v966 = vsub.s32 0, %v965
    %v967 = vrot.slane %v962, %v966
    %969 = vmatprep.subr.mxu0 0.0
    %970 = vmatpush1.msra.mxu0 %v945
    %971 = vmatprep.subr.mxu0 0.0
    %972 = vmatpush1.msra.mxu0 %v944
    %973 = vmatprep.subr.mxu0 0.0
    %974 = vmatpush1.msra.mxu0 %v943
    %975 = vmatprep.subr.mxu0 0.0
    %976 = vmatpush1.msra.mxu0 %v942
    %977 = vmatprep.subr.mxu0 0.0
    %978 = vmatpush1.msra.mxu0 %v941
    %979 = vmatprep.subr.mxu0 0.0
    %980 = vmatpush1.msra.mxu0 %v940
    %981 = vmatprep.subr.mxu0 0.0
    %982 = vmatpush1.msra.mxu0 %v939
    %983 = vmatprep.subr.mxu0 0.0
    %984 = vmatpush1.msra.mxu0 %v938
    %985 = vmatprep.subr.mxu0 0.0
    %986 = vmatpush1.msra.mxu0 %v937
    %987 = vmatprep.subr.mxu0 0.0
    %988 = vmatpush1.msra.mxu0 %v936
    %989 = vmatprep.subr.mxu0 0.0
    %990 = vmatpush1.msra.mxu0 %v935
    %991 = vmatprep.subr.mxu0 0.0
    %992 = vmatpush1.msra.mxu0 %v934
    %993 = vmatprep.subr.mxu0 0.0
    %994 = vmatpush1.msra.mxu0 %v933
    %995 = vmatprep.subr.mxu0 0.0
    %996 = vmatpush1.msra.mxu0 %v932
    %997 = vmatprep.subr.mxu0 0.0
    %998 = vmatpush1.msra.mxu0 %v931
    %999 = vmatprep.subr.mxu0 0.0
    %1000 = vmatpush1.msra.mxu0 %v930
    %1001 = vmatprep.subr.mxu0 0.0
    %1002 = vmatpush2.msra.mxu0 %v961
    %1003 = vmatprep.subr.mxu0 0.0
    %1004 = vmatpush2.msra.mxu0 %v960
    %1005 = vmatprep.subr.mxu0 0.0
    %1006 = vmatpush2.msra.mxu0 %v959
    %1007 = vmatprep.subr.mxu0 0.0
    %1008 = vmatpush2.msra.mxu0 %v958
    %1009 = vmatprep.subr.mxu0 0.0
    %1010 = vmatpush2.msra.mxu0 %v957
    %1011 = vmatprep.subr.mxu0 0.0
    %1012 = vmatpush2.msra.mxu0 %v956
    %1013 = vmatprep.subr.mxu0 0.0
    %1014 = vmatpush2.msra.mxu0 %v955
    %1015 = vmatprep.subr.mxu0 0.0
    %1016 = vmatpush2.msra.mxu0 %v954
    %1017 = vmatprep.subr.mxu0 0.0
    %1018 = vmatpush2.msra.mxu0 %v953
    %1019 = vmatprep.subr.mxu0 0.0
    %1020 = vmatpush2.msra.mxu0 %v952
    %1021 = vmatprep.subr.mxu0 0.0
    %1022 = vmatpush2.msra.mxu0 %v951
    %1023 = vmatprep.subr.mxu0 0.0
    %1024 = vmatpush2.msra.mxu0 %v950
    %1025 = vmatprep.subr.mxu0 0.0
    %1026 = vmatpush2.msra.mxu0 %v949
    %1027 = vmatprep.subr.mxu0 0.0
    %1028 = vmatpush2.msra.mxu0 %v948
    %1029 = vmatprep.subr.mxu0 0.0
    %1030 = vmatpush2.msra.mxu0 %v947
    %1031 = vmatprep.subr.mxu0 0.0
    %1032 = vmatpush2.msra.mxu0 %v946
    %1033 = vmatprep.mubr.f32.mxu0 %v923
    %1034 = vmatmul.mubr.f32.gmra.mxu0 %v922
    %v1035 = vpop.f32.mrf.mxu0
    %v1036 = vadd.f32 %v967, %v1035
    %v1037 = vpop.f32.mrf.mxu0
    %1038 = vmatprep.mubr.f32.mxu0 %v925
    %1039 = vmatmul.mubr.f32.gmra.mxu0 %v924
    %v1040 = vpop.f32.mrf.mxu0
    %v1041 = vadd.f32 %v967, %v1040
    %v1042 = vpop.f32.mrf.mxu0
    %1043 = vmatprep.mubr.f32.mxu0 %v927
    %1044 = vmatmul.mubr.f32.gmra.mxu0 %v926
    %v1045 = vpop.f32.mrf.mxu0
    %v1046 = vadd.f32 %v967, %v1045
    %v1047 = vpop.f32.mrf.mxu0
    %1048 = vmatprep.mubr.f32.mxu0 %v929
    %1049 = vmatmul.mubr.f32.gmra.mxu0 %v928
    %v1050 = vpop.f32.mrf.mxu0
    %v1051 = vadd.f32 %v967, %v1050
    %v1052 = vpop.f32.mrf.mxu0
    %1053 = vdwg.mxu0
    %v1054 = vadd.f32 %v41, %v1036
    %v1055 = vadd.f32 %v42, %v1041
    %v1056 = vadd.f32 %v43, %v1046
    %v1057 = vadd.f32 %v44, %v1051
    %1058 = vst.msk [vmem:[#allocation7] sm:$0xff] %vm65, %v1054
    %1059 = vst.msk [vmem:[#allocation7 + $0x8] sm:$0xff] %vm65, %v1055
    %1060 = vst.msk [vmem:[#allocation7 + $0x10] sm:$0xff] %vm65, %v1056
    %1061 = vst.msk [vmem:[#allocation7 + $0x18] sm:$0xff] %vm65, %v1057
    // Predicated region
    $region34: #{tpu_custom_call.1} parent=1 // pred_check
      _
    $region35: #{tpu_custom_call.1} parent=1 // pred_check_branch
      %1063 = sbr.rel (0) target = $region37
    $region36: #{tpu_custom_call.1} parent=1 // pred_region
      %s1065 = ssub.s32 512, 512
      %1066 = vsyncadd [#allocation6], %s1065
      %s1067 = sshll.u32 [#allocation7], 4
      %s1068 = int_to_ptr.vmem [resolvable:$true] %s1067
      %1073 = dma.vmem_to_hbm [thread:$0]  %s1068, 512, %s7, [#allocation6], 128, 128, 8
    $region37: #{tpu_custom_call.1} parent=1 // pred_fallthru
      _
    // Predicated region
    $region38: #{tpu_custom_call.1} parent=1 // pred_check
      _
    $region39: #{tpu_custom_call.1} parent=1 // pred_check_branch
      %1075 = sbr.rel (0) target = $region41
    $region40: #{tpu_custom_call.1} parent=1 // pred_region
      %1076 = dma.done [#allocation6], 512
    $region41: #{tpu_custom_call.1} parent=1 // pred_fallthru
      _
    %1077 = vsyncpa [#allocation5], 1
    %1078 = vsyncpa [#allocation6], 1

</llo_original>
